<compile_context>
chip_gen: v6e
topology: v6e:2x2x1
jax: 0.10.0
libtpu: 0.0.40
codegen_flags: <defaults>
</compile_context>

<pallas_src>
import jax
import jax.numpy as jnp
from jax import lax
from jax.experimental import pallas as pl
from jax.experimental.pallas import tpu as pltpu

INPUT_SIZE = 29
HIDDEN_SIZE = 64
OUTPUT_SIZE = 29
LEAKY_SLOPE = 0.01

T_BLOCK = 128  # max timesteps per grid step of the recurrence kernel


def _lstm_recurrence_kernel(x_ref, wih_ref, whh_ref, b_ref, h_out_ref,
                            h_scr, c_scr):
    """Sequential LSTM recurrence over one chunk of tb timesteps.

    x_ref    : (tb, Bb, I)  bf16  time-major input chunk
    wih_ref  : (I, 4H)      bf16  input->gates weight (transposed, gate-permuted)
    whh_ref  : (H, 4H)      bf16  hidden->gates weight (transposed, gate-permuted)
    b_ref    : (1, 4H)      f32   b_ih + b_hh (gate-permuted)
    h_out_ref: (tb, Bb, H)  bf16  raw hidden state h_t for every step
    h_scr    : (Bb, H)      bf16  hidden-state carry across chunks
    c_scr    : (Bb, H)      f32   cell-state carry across chunks
    """
    tb = x_ref.shape[0]
    hsz = whh_ref.shape[0]

    @pl.when(pl.program_id(1) == 0)
    def _():
        h_scr[...] = jnp.zeros_like(h_scr)
        c_scr[...] = jnp.zeros_like(c_scr)

    def step(i, carry):
        h_bf, c = carry                                   # (Bb,H) bf16 / f32

        # Input projection for this step: NOT on the serial h-dependence, so
        # with the unrolled loop the scheduler hoists/overlaps it freely.
        gxb = jnp.dot(x_ref[i], wih_ref[...],
                      preferred_element_type=jnp.float32) + b_ref[...]

        # The only true serial dependence: h_{t-1} @ W_hh.
        gh = jnp.dot(h_bf, whh_ref[...], preferred_element_type=jnp.float32)
        gates = gxb + gh                                  # (Bb, 4H) f32

        # Gates are pre-permuted to (i, f, o, g): one sigmoid + one tanh.
        sig = jax.nn.sigmoid(gates[:, :3 * hsz])          # i | f | o
        g_g = jnp.tanh(gates[:, 3 * hsz:])
        i_g = sig[:, :hsz]
        f_g = sig[:, hsz:2 * hsz]
        o_g = sig[:, 2 * hsz:]

        c_new = f_g * c + i_g * g_g
        h_new = (o_g * jnp.tanh(c_new)).astype(jnp.bfloat16)

        h_out_ref[i] = h_new                              # raw h_t (bf16)
        return h_new, c_new

    unroll = tb if tb <= 16 else 8                        # tb>16 is a mult. of 8
    h_fin, c_fin = lax.fori_loop(0, tb, step, (h_scr[...], c_scr[...]),
                                 unroll=unroll)
    h_scr[...] = h_fin
    c_scr[...] = c_fin


def _permute_gates(m):
    """Reorder PyTorch gate blocks (i, f, g, o) -> (i, f, o, g) along axis 0."""
    H = HIDDEN_SIZE
    return jnp.concatenate([m[:2 * H], m[3 * H:], m[2 * H:3 * H]], axis=0)


def _choose_time_block(T, Bb):
    """Chunk length: balanced (minimal padded serial steps), VMEM-budgeted."""
    if T <= 16:
        return T, 1                       # single chunk, fully unrolled, no pad
    # Double-buffered x block + double-buffered h-out block, lane-padded bf16.
    per_t = 4 * Bb * 128 * 2
    cap = max(8, (12 * 1024 * 1024) // per_t)     # fits every generation
    tb = min(T_BLOCK, cap, T)
    n_chunks = -(-T // tb)
    tb = -(-T // n_chunks)                # balance chunks
    tb = ((tb + 7) // 8) * 8              # multiple of 8 (sublanes / unroll)
    n_chunks = -(-T // tb)
    return tb, n_chunks


@jax.jit
def lstm_forward(x, params):
    """x: (B, T, INPUT_SIZE) float32 -> (B, OUTPUT_SIZE, T) float32."""
    x = jnp.asarray(x, jnp.float32)
    B, T, I = x.shape
    H, O = HIDDEN_SIZE, OUTPUT_SIZE
    assert I == INPUT_SIZE

    # Gate-permuted, MXU-ready weights (trace-time, free).
    wih_t = _permute_gates(params["w_ih"]).T.astype(jnp.bfloat16)     # (I, 4H)
    whh_t = _permute_gates(params["w_hh"]).T.astype(jnp.bfloat16)     # (H, 4H)
    b_gate = _permute_gates(params["b_ih"] + params["b_hh"])
    b_gate = b_gate.reshape(1, 4 * H).astype(jnp.float32)             # (1, 4H)

    # Batch split across a "parallel" grid axis: on multi-TC chips (v7x) the
    # two independent serial chains run on separate TensorCores; enabled only
    # at batch sizes where it is throughput-neutral on single-TC chips.
    nb = 2 if (B >= 256 and B % 16 == 0) else 1
    Bb = B // nb

    tb, n_chunks = _choose_time_block(T, Bb)
    t_pad = tb * n_chunks

    # Time-major bf16 input (9x smaller than the old (T,B,4H) f32 gx rewrite).
    x_tm = jnp.transpose(x, (1, 0, 2)).astype(jnp.bfloat16)           # (T, B, I)
    if t_pad != T:
        x_tm = jnp.pad(x_tm, ((0, t_pad - T), (0, 0), (0, 0)))

    h_seq = pl.pallas_call(
        _lstm_recurrence_kernel,
        out_shape=jax.ShapeDtypeStruct((t_pad, B, H), jnp.bfloat16),
        grid_spec=pltpu.PrefetchScalarGridSpec(
            num_scalar_prefetch=0,
            grid=(nb, n_chunks),
            in_specs=[
                pl.BlockSpec((tb, Bb, I), lambda b, t: (t, b, 0)),
                pl.BlockSpec((I, 4 * H), lambda b, t: (0, 0)),
                pl.BlockSpec((H, 4 * H), lambda b, t: (0, 0)),
                pl.BlockSpec((1, 4 * H), lambda b, t: (0, 0)),
            ],
            out_specs=pl.BlockSpec((tb, Bb, H), lambda b, t: (t, b, 0)),
            scratch_shapes=[
                pltpu.VMEM((Bb, H), jnp.bfloat16),   # h carry (bf16 = MXU input)
                pltpu.VMEM((Bb, H), jnp.float32),    # c carry
            ],
        ),
        compiler_params=pltpu.CompilerParams(
            dimension_semantics=("parallel", "arbitrary"),
            vmem_limit_bytes=32 * 1024 * 1024,
        ),
    )(x_tm, wih_t, whh_t, b_gate)

    # LeakyReLU + Linear(64 -> 29) + transpose: left to XLA (a 64x29 GEMM
    # gains nothing from Pallas and would force masked 29-lane stores).
    hs = h_seq[:T].astype(jnp.float32)                    # (T, B, H)
    act = jnp.where(hs > 0, hs, LEAKY_SLOPE * hs)
    out = jnp.einsum("tbh,oh->bot", act, params["w_l1"].astype(jnp.float32))
    out = out + params["b_l1"].astype(jnp.float32)[None, :, None]
    return out                                            # (B, O, T)


def init_params(key):
    """Deterministic parameter init with PyTorch nn.LSTM / nn.Linear shapes."""
    ks = jax.random.split(key, 6)
    k = 1.0 / jnp.sqrt(HIDDEN_SIZE)
    return {
        "w_ih": jax.random.uniform(ks[0], (4 * HIDDEN_SIZE, INPUT_SIZE),
                                   jnp.float32, -k, k),
        "w_hh": jax.random.uniform(ks[1], (4 * HIDDEN_SIZE, HIDDEN_SIZE),
                                   jnp.float32, -k, k),
        "b_ih": jax.random.uniform(ks[2], (4 * HIDDEN_SIZE,),
                                   jnp.float32, -k, k),
        "b_hh": jax.random.uniform(ks[3], (4 * HIDDEN_SIZE,),
                                   jnp.float32, -k, k),
        "w_l1": jax.random.uniform(ks[4], (OUTPUT_SIZE, HIDDEN_SIZE),
                                   jnp.float32, -k, k),
        "b_l1": jax.random.uniform(ks[5], (OUTPUT_SIZE,),
                                   jnp.float32, -k, k),
    }


def _reference_forward(x, params):
    """Pure-JAX f32 reference of the same forward pass (sanity check)."""
    B, T, _ = x.shape
    h = jnp.zeros((B, HIDDEN_SIZE), jnp.float32)
    c = jnp.zeros((B, HIDDEN_SIZE), jnp.float32)
    w_ih_t = params["w_ih"].T
    w_hh_t = params["w_hh"].T
    b = params["b_ih"] + params["b_hh"]

    def step(carry, x_t):
        h, c = carry
        g = x_t @ w_ih_t + h @ w_hh_t + b
        Hs = HIDDEN_SIZE
        i = jax.nn.sigmoid(g[:, :Hs])
        f = jax.nn.sigmoid(g[:, Hs:2 * Hs])
        gg = jnp.tanh(g[:, 2 * Hs:3 * Hs])
        o = jax.nn.sigmoid(g[:, 3 * Hs:])
        c = f * c + i * gg
        h = o * jnp.tanh(c)
        return (h, c), h

    (_, _), hs = jax.lax.scan(step, (h, c), jnp.transpose(x, (1, 0, 2)))
    hs = jnp.transpose(hs, (1, 0, 2))                     # (B, T, H)
    hs = jnp.where(hs > 0, hs, LEAKY_SLOPE * hs)
    out = hs @ params["w_l1"].T + params["b_l1"]          # (B, T, O)
    return jnp.transpose(out, (0, 2, 1))                  # (B, O, T)


if __name__ == "__main__":
    key = jax.random.PRNGKey(0)
    pkey, xkey = jax.random.split(key)
    params = init_params(pkey)

    B, T = 2, 8
    x = jax.random.normal(xkey, (B, T, INPUT_SIZE), jnp.float32)

    out = lstm_forward(x, params)
    jax.block_until_ready(out)

    ref = _reference_forward(x, params)
    assert out.shape == (B, OUTPUT_SIZE, T), out.shape
    # bf16 MXU operands / bf16 hidden carry -> loosened tolerance vs f32 ref.
    assert jnp.allclose(out, ref, atol=3e-2, rtol=3e-2), "mismatch vs reference"

    print("KERNEL_OK")
</pallas_src>

<mosaic_0001>
module attributes {stable_mosaic.version = 11 : i64} {
  func.func @_lstm_recurrence_kernel(%arg0: i32, %arg1: i32, %arg2: memref<8x2x29xbf16, #tpu.memory_space<vmem>>, %arg3: memref<29x256xbf16, #tpu.memory_space<vmem>>, %arg4: memref<64x256xbf16, #tpu.memory_space<vmem>>, %arg5: memref<1x256xf32, #tpu.memory_space<vmem>>, %arg6: memref<8x2x64xbf16, #tpu.memory_space<vmem>>, %arg7: memref<2x64xbf16, #tpu.memory_space<vmem>>, %arg8: memref<2x64xf32, #tpu.memory_space<vmem>>) attributes {dimension_semantics = [#tpu.dimension_semantics<parallel>, #tpu.dimension_semantics<arbitrary>], iteration_bounds = array<i64: 1, 1>, scalar_prefetch = 0 : i64, scratch_operands = 2 : i64, tpu.core_type = #tpu.core_type<tc>, window_params = [{transform_indices = @transform_0, window_bounds = array<i64: 8, 2, 29>}, {pipeline_mode = #tpu.pipeline_mode<synchronous>, transform_indices = @transform_1, window_bounds = array<i64: 29, 256>}, {pipeline_mode = #tpu.pipeline_mode<synchronous>, transform_indices = @transform_2, window_bounds = array<i64: 64, 256>}, {pipeline_mode = #tpu.pipeline_mode<synchronous>, transform_indices = @transform_3, window_bounds = array<i64: 1, 256>}, {transform_indices = @transform_4, window_bounds = array<i64: 8, 2, 64>}]} {
    %c0_i32 = arith.constant 0 : i32
    %0 = arith.cmpi eq, %arg1, %c0_i32 : i32
    %1 = arith.extui %0 : i1 to i32
    %c0_i32_0 = arith.constant 0 : i32
    %2 = arith.cmpi ne, %1, %c0_i32_0 : i32
    scf.if %2 {
      %cst_112 = arith.constant 0.000000e+00 : bf16
      %263 = vector.broadcast %cst_112 : bf16 to vector<2x64xbf16>
      %c0_113 = arith.constant 0 : index
      %c0_114 = arith.constant 0 : index
      %264 = vector.load %arg7[%c0_113, %c0_114] : memref<2x64xbf16, #tpu.memory_space<vmem>>, vector<2x64xbf16>
      tpu.vector_store %arg7[%c0_113, %c0_114], %263 {strides = array<i32>} : memref<2x64xbf16, #tpu.memory_space<vmem>>, vector<2x64xbf16>,
      %cst_115 = arith.constant 0.000000e+00 : f32
      %265 = vector.broadcast %cst_115 : f32 to vector<2x64xf32>
      %c0_116 = arith.constant 0 : index
      %c0_117 = arith.constant 0 : index
      %266 = vector.load %arg8[%c0_116, %c0_117] : memref<2x64xf32, #tpu.memory_space<vmem>>, vector<2x64xf32>
      tpu.vector_store %arg8[%c0_116, %c0_117], %265 {strides = array<i32>} : memref<2x64xf32, #tpu.memory_space<vmem>>, vector<2x64xf32>,
    } else {
    }
    %c0 = arith.constant 0 : index
    %c0_1 = arith.constant 0 : index
    %3 = vector.load %arg7[%c0, %c0_1] : memref<2x64xbf16, #tpu.memory_space<vmem>>, vector<2x64xbf16>
    %c0_2 = arith.constant 0 : index
    %c0_3 = arith.constant 0 : index
    %4 = vector.load %arg8[%c0_2, %c0_3] : memref<2x64xf32, #tpu.memory_space<vmem>>, vector<2x64xf32>
    %c0_i32_4 = arith.constant 0 : i32
    %5 = arith.index_cast %c0_i32_4 : i32 to index
    %c0_5 = arith.constant 0 : index
    %c0_6 = arith.constant 0 : index
    %6 = vector.load %arg2[%5, %c0_5, %c0_6] : memref<8x2x29xbf16, #tpu.memory_space<vmem>>, vector<1x2x29xbf16>
    %7 = vector.shape_cast %6 : vector<1x2x29xbf16> to vector<2x29xbf16>
    %c0_7 = arith.constant 0 : index
    %c0_8 = arith.constant 0 : index
    %8 = vector.load %arg3[%c0_7, %c0_8] : memref<29x256xbf16, #tpu.memory_space<vmem>>, vector<29x256xbf16>
    %cst = arith.constant dense<0.000000e+00> : vector<2x256xf32>
    %9 = tpu.matmul %7, %8, %cst {dimension_numbers = #tpu.dot_dimension_numbers<[1], [0], [0], [1], [0, 0, 1, 1], [], []>} : vector<2x29xbf16>, vector<29x256xbf16>, vector<2x256xf32> -> vector<2x256xf32>
    %c0_9 = arith.constant 0 : index
    %c0_10 = arith.constant 0 : index
    %10 = vector.load %arg5[%c0_9, %c0_10] : memref<1x256xf32, #tpu.memory_space<vmem>>, vector<1x256xf32>
    %11 = vector.broadcast %10 : vector<1x256xf32> to vector<2x256xf32>
    %12 = arith.addf %9, %11 : vector<2x256xf32>
    %c0_11 = arith.constant 0 : index
    %c0_12 = arith.constant 0 : index
    %13 = vector.load %arg4[%c0_11, %c0_12] : memref<64x256xbf16, #tpu.memory_space<vmem>>, vector<64x256xbf16>
    %cst_13 = arith.constant dense<0.000000e+00> : vector<2x256xf32>
    %14 = tpu.matmul %3, %13, %cst_13 {dimension_numbers = #tpu.dot_dimension_numbers<[1], [0], [0], [1], [0, 0, 1, 1], [], []>} : vector<2x64xbf16>, vector<64x256xbf16>, vector<2x256xf32> -> vector<2x256xf32>
    %15 = arith.addf %12, %14 : vector<2x256xf32>
    %16 = vector.extract_strided_slice %15 {offsets = [0, 0], sizes = [2, 192], strides = [1, 1]} : vector<2x256xf32> to vector<2x192xf32>
    %17 = arith.negf %16 : vector<2x192xf32>
    %18 = math.exp %17 : vector<2x192xf32>
    %cst_14 = arith.constant 1.000000e+00 : f32
    %19 = vector.broadcast %cst_14 : f32 to vector<2x192xf32>
    %20 = arith.addf %19, %18 : vector<2x192xf32>
    %21 = arith.divf %19, %20 : vector<2x192xf32>
    %22 = vector.extract_strided_slice %15 {offsets = [0, 192], sizes = [2, 64], strides = [1, 1]} : vector<2x256xf32> to vector<2x64xf32>
    %23 = math.tanh %22 : vector<2x64xf32>
    %24 = vector.extract_strided_slice %21 {offsets = [0, 0], sizes = [2, 64], strides = [1, 1]} : vector<2x192xf32> to vector<2x64xf32>
    %25 = vector.extract_strided_slice %21 {offsets = [0, 64], sizes = [2, 64], strides = [1, 1]} : vector<2x192xf32> to vector<2x64xf32>
    %26 = vector.extract_strided_slice %21 {offsets = [0, 128], sizes = [2, 64], strides = [1, 1]} : vector<2x192xf32> to vector<2x64xf32>
    %27 = arith.mulf %25, %4 : vector<2x64xf32>
    %28 = arith.mulf %24, %23 : vector<2x64xf32>
    %29 = arith.addf %27, %28 : vector<2x64xf32>
    %30 = math.tanh %29 : vector<2x64xf32>
    %31 = arith.mulf %26, %30 : vector<2x64xf32>
    %32 = arith.truncf %31 : vector<2x64xf32> to vector<2x64xbf16>
    %33 = arith.index_cast %c0_i32_4 : i32 to index
    %c0_15 = arith.constant 0 : index
    %c0_16 = arith.constant 0 : index
    %34 = vector.load %arg6[%33, %c0_15, %c0_16] : memref<8x2x64xbf16, #tpu.memory_space<vmem>>, vector<1x2x64xbf16>
    %35 = vector.shape_cast %34 : vector<1x2x64xbf16> to vector<2x64xbf16>
    %36 = vector.shape_cast %32 : vector<2x64xbf16> to vector<1x2x64xbf16>
    tpu.vector_store %arg6[%33, %c0_15, %c0_16], %36 {strides = array<i32>} : memref<8x2x64xbf16, #tpu.memory_space<vmem>>, vector<1x2x64xbf16>,
    %c1_i32 = arith.constant 1 : i32
    %37 = arith.index_cast %c1_i32 : i32 to index
    %c0_17 = arith.constant 0 : index
    %c0_18 = arith.constant 0 : index
    %38 = vector.load %arg2[%37, %c0_17, %c0_18] : memref<8x2x29xbf16, #tpu.memory_space<vmem>>, vector<1x2x29xbf16>
    %39 = vector.shape_cast %38 : vector<1x2x29xbf16> to vector<2x29xbf16>
    %c0_19 = arith.constant 0 : index
    %c0_20 = arith.constant 0 : index
    %40 = vector.load %arg3[%c0_19, %c0_20] : memref<29x256xbf16, #tpu.memory_space<vmem>>, vector<29x256xbf16>
    %cst_21 = arith.constant dense<0.000000e+00> : vector<2x256xf32>
    %41 = tpu.matmul %39, %40, %cst_21 {dimension_numbers = #tpu.dot_dimension_numbers<[1], [0], [0], [1], [0, 0, 1, 1], [], []>} : vector<2x29xbf16>, vector<29x256xbf16>, vector<2x256xf32> -> vector<2x256xf32>
    %c0_22 = arith.constant 0 : index
    %c0_23 = arith.constant 0 : index
    %42 = vector.load %arg5[%c0_22, %c0_23] : memref<1x256xf32, #tpu.memory_space<vmem>>, vector<1x256xf32>
    %43 = vector.broadcast %42 : vector<1x256xf32> to vector<2x256xf32>
    %44 = arith.addf %41, %43 : vector<2x256xf32>
    %c0_24 = arith.constant 0 : index
    %c0_25 = arith.constant 0 : index
    %45 = vector.load %arg4[%c0_24, %c0_25] : memref<64x256xbf16, #tpu.memory_space<vmem>>, vector<64x256xbf16>
    %cst_26 = arith.constant dense<0.000000e+00> : vector<2x256xf32>
    %46 = tpu.matmul %32, %45, %cst_26 {dimension_numbers = #tpu.dot_dimension_numbers<[1], [0], [0], [1], [0, 0, 1, 1], [], []>} : vector<2x64xbf16>, vector<64x256xbf16>, vector<2x256xf32> -> vector<2x256xf32>
    %47 = arith.addf %44, %46 : vector<2x256xf32>
    %48 = vector.extract_strided_slice %47 {offsets = [0, 0], sizes = [2, 192], strides = [1, 1]} : vector<2x256xf32> to vector<2x192xf32>
    %49 = arith.negf %48 : vector<2x192xf32>
    %50 = math.exp %49 : vector<2x192xf32>
    %cst_27 = arith.constant 1.000000e+00 : f32
    %51 = vector.broadcast %cst_27 : f32 to vector<2x192xf32>
    %52 = arith.addf %51, %50 : vector<2x192xf32>
    %53 = arith.divf %51, %52 : vector<2x192xf32>
    %54 = vector.extract_strided_slice %47 {offsets = [0, 192], sizes = [2, 64], strides = [1, 1]} : vector<2x256xf32> to vector<2x64xf32>
    %55 = math.tanh %54 : vector<2x64xf32>
    %56 = vector.extract_strided_slice %53 {offsets = [0, 0], sizes = [2, 64], strides = [1, 1]} : vector<2x192xf32> to vector<2x64xf32>
    %57 = vector.extract_strided_slice %53 {offsets = [0, 64], sizes = [2, 64], strides = [1, 1]} : vector<2x192xf32> to vector<2x64xf32>
    %58 = vector.extract_strided_slice %53 {offsets = [0, 128], sizes = [2, 64], strides = [1, 1]} : vector<2x192xf32> to vector<2x64xf32>
    %59 = arith.mulf %57, %29 : vector<2x64xf32>
    %60 = arith.mulf %56, %55 : vector<2x64xf32>
    %61 = arith.addf %59, %60 : vector<2x64xf32>
    %62 = math.tanh %61 : vector<2x64xf32>
    %63 = arith.mulf %58, %62 : vector<2x64xf32>
    %64 = arith.truncf %63 : vector<2x64xf32> to vector<2x64xbf16>
    %65 = arith.index_cast %c1_i32 : i32 to index
    %c0_28 = arith.constant 0 : index
    %c0_29 = arith.constant 0 : index
    %66 = vector.load %arg6[%65, %c0_28, %c0_29] : memref<8x2x64xbf16, #tpu.memory_space<vmem>>, vector<1x2x64xbf16>
    %67 = vector.shape_cast %66 : vector<1x2x64xbf16> to vector<2x64xbf16>
    %68 = vector.shape_cast %64 : vector<2x64xbf16> to vector<1x2x64xbf16>
    tpu.vector_store %arg6[%65, %c0_28, %c0_29], %68 {strides = array<i32>} : memref<8x2x64xbf16, #tpu.memory_space<vmem>>, vector<1x2x64xbf16>,
    %c2_i32 = arith.constant 2 : i32
    %69 = arith.index_cast %c2_i32 : i32 to index
    %c0_30 = arith.constant 0 : index
    %c0_31 = arith.constant 0 : index
    %70 = vector.load %arg2[%69, %c0_30, %c0_31] : memref<8x2x29xbf16, #tpu.memory_space<vmem>>, vector<1x2x29xbf16>
    %71 = vector.shape_cast %70 : vector<1x2x29xbf16> to vector<2x29xbf16>
    %c0_32 = arith.constant 0 : index
    %c0_33 = arith.constant 0 : index
    %72 = vector.load %arg3[%c0_32, %c0_33] : memref<29x256xbf16, #tpu.memory_space<vmem>>, vector<29x256xbf16>
    %cst_34 = arith.constant dense<0.000000e+00> : vector<2x256xf32>
    %73 = tpu.matmul %71, %72, %cst_34 {dimension_numbers = #tpu.dot_dimension_numbers<[1], [0], [0], [1], [0, 0, 1, 1], [], []>} : vector<2x29xbf16>, vector<29x256xbf16>, vector<2x256xf32> -> vector<2x256xf32>
    %c0_35 = arith.constant 0 : index
    %c0_36 = arith.constant 0 : index
    %74 = vector.load %arg5[%c0_35, %c0_36] : memref<1x256xf32, #tpu.memory_space<vmem>>, vector<1x256xf32>
    %75 = vector.broadcast %74 : vector<1x256xf32> to vector<2x256xf32>
    %76 = arith.addf %73, %75 : vector<2x256xf32>
    %c0_37 = arith.constant 0 : index
    %c0_38 = arith.constant 0 : index
    %77 = vector.load %arg4[%c0_37, %c0_38] : memref<64x256xbf16, #tpu.memory_space<vmem>>, vector<64x256xbf16>
    %cst_39 = arith.constant dense<0.000000e+00> : vector<2x256xf32>
    %78 = tpu.matmul %64, %77, %cst_39 {dimension_numbers = #tpu.dot_dimension_numbers<[1], [0], [0], [1], [0, 0, 1, 1], [], []>} : vector<2x64xbf16>, vector<64x256xbf16>, vector<2x256xf32> -> vector<2x256xf32>
    %79 = arith.addf %76, %78 : vector<2x256xf32>
    %80 = vector.extract_strided_slice %79 {offsets = [0, 0], sizes = [2, 192], strides = [1, 1]} : vector<2x256xf32> to vector<2x192xf32>
    %81 = arith.negf %80 : vector<2x192xf32>
    %82 = math.exp %81 : vector<2x192xf32>
    %cst_40 = arith.constant 1.000000e+00 : f32
    %83 = vector.broadcast %cst_40 : f32 to vector<2x192xf32>
    %84 = arith.addf %83, %82 : vector<2x192xf32>
    %85 = arith.divf %83, %84 : vector<2x192xf32>
    %86 = vector.extract_strided_slice %79 {offsets = [0, 192], sizes = [2, 64], strides = [1, 1]} : vector<2x256xf32> to vector<2x64xf32>
    %87 = math.tanh %86 : vector<2x64xf32>
    %88 = vector.extract_strided_slice %85 {offsets = [0, 0], sizes = [2, 64], strides = [1, 1]} : vector<2x192xf32> to vector<2x64xf32>
    %89 = vector.extract_strided_slice %85 {offsets = [0, 64], sizes = [2, 64], strides = [1, 1]} : vector<2x192xf32> to vector<2x64xf32>
    %90 = vector.extract_strided_slice %85 {offsets = [0, 128], sizes = [2, 64], strides = [1, 1]} : vector<2x192xf32> to vector<2x64xf32>
    %91 = arith.mulf %89, %61 : vector<2x64xf32>
    %92 = arith.mulf %88, %87 : vector<2x64xf32>
    %93 = arith.addf %91, %92 : vector<2x64xf32>
    %94 = math.tanh %93 : vector<2x64xf32>
    %95 = arith.mulf %90, %94 : vector<2x64xf32>
    %96 = arith.truncf %95 : vector<2x64xf32> to vector<2x64xbf16>
    %97 = arith.index_cast %c2_i32 : i32 to index
    %c0_41 = arith.constant 0 : index
    %c0_42 = arith.constant 0 : index
    %98 = vector.load %arg6[%97, %c0_41, %c0_42] : memref<8x2x64xbf16, #tpu.memory_space<vmem>>, vector<1x2x64xbf16>
    %99 = vector.shape_cast %98 : vector<1x2x64xbf16> to vector<2x64xbf16>
    %100 = vector.shape_cast %96 : vector<2x64xbf16> to vector<1x2x64xbf16>
    tpu.vector_store %arg6[%97, %c0_41, %c0_42], %100 {strides = array<i32>} : memref<8x2x64xbf16, #tpu.memory_space<vmem>>, vector<1x2x64xbf16>,
    %c3_i32 = arith.constant 3 : i32
    %101 = arith.index_cast %c3_i32 : i32 to index
    %c0_43 = arith.constant 0 : index
    %c0_44 = arith.constant 0 : index
    %102 = vector.load %arg2[%101, %c0_43, %c0_44] : memref<8x2x29xbf16, #tpu.memory_space<vmem>>, vector<1x2x29xbf16>
    %103 = vector.shape_cast %102 : vector<1x2x29xbf16> to vector<2x29xbf16>
    %c0_45 = arith.constant 0 : index
    %c0_46 = arith.constant 0 : index
    %104 = vector.load %arg3[%c0_45, %c0_46] : memref<29x256xbf16, #tpu.memory_space<vmem>>, vector<29x256xbf16>
    %cst_47 = arith.constant dense<0.000000e+00> : vector<2x256xf32>
    %105 = tpu.matmul %103, %104, %cst_47 {dimension_numbers = #tpu.dot_dimension_numbers<[1], [0], [0], [1], [0, 0, 1, 1], [], []>} : vector<2x29xbf16>, vector<29x256xbf16>, vector<2x256xf32> -> vector<2x256xf32>
    %c0_48 = arith.constant 0 : index
    %c0_49 = arith.constant 0 : index
    %106 = vector.load %arg5[%c0_48, %c0_49] : memref<1x256xf32, #tpu.memory_space<vmem>>, vector<1x256xf32>
    %107 = vector.broadcast %106 : vector<1x256xf32> to vector<2x256xf32>
    %108 = arith.addf %105, %107 : vector<2x256xf32>
    %c0_50 = arith.constant 0 : index
    %c0_51 = arith.constant 0 : index
    %109 = vector.load %arg4[%c0_50, %c0_51] : memref<64x256xbf16, #tpu.memory_space<vmem>>, vector<64x256xbf16>
    %cst_52 = arith.constant dense<0.000000e+00> : vector<2x256xf32>
    %110 = tpu.matmul %96, %109, %cst_52 {dimension_numbers = #tpu.dot_dimension_numbers<[1], [0], [0], [1], [0, 0, 1, 1], [], []>} : vector<2x64xbf16>, vector<64x256xbf16>, vector<2x256xf32> -> vector<2x256xf32>
    %111 = arith.addf %108, %110 : vector<2x256xf32>
    %112 = vector.extract_strided_slice %111 {offsets = [0, 0], sizes = [2, 192], strides = [1, 1]} : vector<2x256xf32> to vector<2x192xf32>
    %113 = arith.negf %112 : vector<2x192xf32>
    %114 = math.exp %113 : vector<2x192xf32>
    %cst_53 = arith.constant 1.000000e+00 : f32
    %115 = vector.broadcast %cst_53 : f32 to vector<2x192xf32>
    %116 = arith.addf %115, %114 : vector<2x192xf32>
    %117 = arith.divf %115, %116 : vector<2x192xf32>
    %118 = vector.extract_strided_slice %111 {offsets = [0, 192], sizes = [2, 64], strides = [1, 1]} : vector<2x256xf32> to vector<2x64xf32>
    %119 = math.tanh %118 : vector<2x64xf32>
    %120 = vector.extract_strided_slice %117 {offsets = [0, 0], sizes = [2, 64], strides = [1, 1]} : vector<2x192xf32> to vector<2x64xf32>
    %121 = vector.extract_strided_slice %117 {offsets = [0, 64], sizes = [2, 64], strides = [1, 1]} : vector<2x192xf32> to vector<2x64xf32>
    %122 = vector.extract_strided_slice %117 {offsets = [0, 128], sizes = [2, 64], strides = [1, 1]} : vector<2x192xf32> to vector<2x64xf32>
    %123 = arith.mulf %121, %93 : vector<2x64xf32>
    %124 = arith.mulf %120, %119 : vector<2x64xf32>
    %125 = arith.addf %123, %124 : vector<2x64xf32>
    %126 = math.tanh %125 : vector<2x64xf32>
    %127 = arith.mulf %122, %126 : vector<2x64xf32>
    %128 = arith.truncf %127 : vector<2x64xf32> to vector<2x64xbf16>
    %129 = arith.index_cast %c3_i32 : i32 to index
    %c0_54 = arith.constant 0 : index
    %c0_55 = arith.constant 0 : index
    %130 = vector.load %arg6[%129, %c0_54, %c0_55] : memref<8x2x64xbf16, #tpu.memory_space<vmem>>, vector<1x2x64xbf16>
    %131 = vector.shape_cast %130 : vector<1x2x64xbf16> to vector<2x64xbf16>
    %132 = vector.shape_cast %128 : vector<2x64xbf16> to vector<1x2x64xbf16>
    tpu.vector_store %arg6[%129, %c0_54, %c0_55], %132 {strides = array<i32>} : memref<8x2x64xbf16, #tpu.memory_space<vmem>>, vector<1x2x64xbf16>,
    %c4_i32 = arith.constant 4 : i32
    %133 = arith.index_cast %c4_i32 : i32 to index
    %c0_56 = arith.constant 0 : index
    %c0_57 = arith.constant 0 : index
    %134 = vector.load %arg2[%133, %c0_56, %c0_57] : memref<8x2x29xbf16, #tpu.memory_space<vmem>>, vector<1x2x29xbf16>
    %135 = vector.shape_cast %134 : vector<1x2x29xbf16> to vector<2x29xbf16>
    %c0_58 = arith.constant 0 : index
    %c0_59 = arith.constant 0 : index
    %136 = vector.load %arg3[%c0_58, %c0_59] : memref<29x256xbf16, #tpu.memory_space<vmem>>, vector<29x256xbf16>
    %cst_60 = arith.constant dense<0.000000e+00> : vector<2x256xf32>
    %137 = tpu.matmul %135, %136, %cst_60 {dimension_numbers = #tpu.dot_dimension_numbers<[1], [0], [0], [1], [0, 0, 1, 1], [], []>} : vector<2x29xbf16>, vector<29x256xbf16>, vector<2x256xf32> -> vector<2x256xf32>
    %c0_61 = arith.constant 0 : index
    %c0_62 = arith.constant 0 : index
    %138 = vector.load %arg5[%c0_61, %c0_62] : memref<1x256xf32, #tpu.memory_space<vmem>>, vector<1x256xf32>
    %139 = vector.broadcast %138 : vector<1x256xf32> to vector<2x256xf32>
    %140 = arith.addf %137, %139 : vector<2x256xf32>
    %c0_63 = arith.constant 0 : index
    %c0_64 = arith.constant 0 : index
    %141 = vector.load %arg4[%c0_63, %c0_64] : memref<64x256xbf16, #tpu.memory_space<vmem>>, vector<64x256xbf16>
    %cst_65 = arith.constant dense<0.000000e+00> : vector<2x256xf32>
    %142 = tpu.matmul %128, %141, %cst_65 {dimension_numbers = #tpu.dot_dimension_numbers<[1], [0], [0], [1], [0, 0, 1, 1], [], []>} : vector<2x64xbf16>, vector<64x256xbf16>, vector<2x256xf32> -> vector<2x256xf32>
    %143 = arith.addf %140, %142 : vector<2x256xf32>
    %144 = vector.extract_strided_slice %143 {offsets = [0, 0], sizes = [2, 192], strides = [1, 1]} : vector<2x256xf32> to vector<2x192xf32>
    %145 = arith.negf %144 : vector<2x192xf32>
    %146 = math.exp %145 : vector<2x192xf32>
    %cst_66 = arith.constant 1.000000e+00 : f32
    %147 = vector.broadcast %cst_66 : f32 to vector<2x192xf32>
    %148 = arith.addf %147, %146 : vector<2x192xf32>
    %149 = arith.divf %147, %148 : vector<2x192xf32>
    %150 = vector.extract_strided_slice %143 {offsets = [0, 192], sizes = [2, 64], strides = [1, 1]} : vector<2x256xf32> to vector<2x64xf32>
    %151 = math.tanh %150 : vector<2x64xf32>
    %152 = vector.extract_strided_slice %149 {offsets = [0, 0], sizes = [2, 64], strides = [1, 1]} : vector<2x192xf32> to vector<2x64xf32>
    %153 = vector.extract_strided_slice %149 {offsets = [0, 64], sizes = [2, 64], strides = [1, 1]} : vector<2x192xf32> to vector<2x64xf32>
    %154 = vector.extract_strided_slice %149 {offsets = [0, 128], sizes = [2, 64], strides = [1, 1]} : vector<2x192xf32> to vector<2x64xf32>
    %155 = arith.mulf %153, %125 : vector<2x64xf32>
    %156 = arith.mulf %152, %151 : vector<2x64xf32>
    %157 = arith.addf %155, %156 : vector<2x64xf32>
    %158 = math.tanh %157 : vector<2x64xf32>
    %159 = arith.mulf %154, %158 : vector<2x64xf32>
    %160 = arith.truncf %159 : vector<2x64xf32> to vector<2x64xbf16>
    %161 = arith.index_cast %c4_i32 : i32 to index
    %c0_67 = arith.constant 0 : index
    %c0_68 = arith.constant 0 : index
    %162 = vector.load %arg6[%161, %c0_67, %c0_68] : memref<8x2x64xbf16, #tpu.memory_space<vmem>>, vector<1x2x64xbf16>
    %163 = vector.shape_cast %162 : vector<1x2x64xbf16> to vector<2x64xbf16>
    %164 = vector.shape_cast %160 : vector<2x64xbf16> to vector<1x2x64xbf16>
    tpu.vector_store %arg6[%161, %c0_67, %c0_68], %164 {strides = array<i32>} : memref<8x2x64xbf16, #tpu.memory_space<vmem>>, vector<1x2x64xbf16>,
    %c5_i32 = arith.constant 5 : i32
    %165 = arith.index_cast %c5_i32 : i32 to index
    %c0_69 = arith.constant 0 : index
    %c0_70 = arith.constant 0 : index
    %166 = vector.load %arg2[%165, %c0_69, %c0_70] : memref<8x2x29xbf16, #tpu.memory_space<vmem>>, vector<1x2x29xbf16>
    %167 = vector.shape_cast %166 : vector<1x2x29xbf16> to vector<2x29xbf16>
    %c0_71 = arith.constant 0 : index
    %c0_72 = arith.constant 0 : index
    %168 = vector.load %arg3[%c0_71, %c0_72] : memref<29x256xbf16, #tpu.memory_space<vmem>>, vector<29x256xbf16>
    %cst_73 = arith.constant dense<0.000000e+00> : vector<2x256xf32>
    %169 = tpu.matmul %167, %168, %cst_73 {dimension_numbers = #tpu.dot_dimension_numbers<[1], [0], [0], [1], [0, 0, 1, 1], [], []>} : vector<2x29xbf16>, vector<29x256xbf16>, vector<2x256xf32> -> vector<2x256xf32>
    %c0_74 = arith.constant 0 : index
    %c0_75 = arith.constant 0 : index
    %170 = vector.load %arg5[%c0_74, %c0_75] : memref<1x256xf32, #tpu.memory_space<vmem>>, vector<1x256xf32>
    %171 = vector.broadcast %170 : vector<1x256xf32> to vector<2x256xf32>
    %172 = arith.addf %169, %171 : vector<2x256xf32>
    %c0_76 = arith.constant 0 : index
    %c0_77 = arith.constant 0 : index
    %173 = vector.load %arg4[%c0_76, %c0_77] : memref<64x256xbf16, #tpu.memory_space<vmem>>, vector<64x256xbf16>
    %cst_78 = arith.constant dense<0.000000e+00> : vector<2x256xf32>
    %174 = tpu.matmul %160, %173, %cst_78 {dimension_numbers = #tpu.dot_dimension_numbers<[1], [0], [0], [1], [0, 0, 1, 1], [], []>} : vector<2x64xbf16>, vector<64x256xbf16>, vector<2x256xf32> -> vector<2x256xf32>
    %175 = arith.addf %172, %174 : vector<2x256xf32>
    %176 = vector.extract_strided_slice %175 {offsets = [0, 0], sizes = [2, 192], strides = [1, 1]} : vector<2x256xf32> to vector<2x192xf32>
    %177 = arith.negf %176 : vector<2x192xf32>
    %178 = math.exp %177 : vector<2x192xf32>
    %cst_79 = arith.constant 1.000000e+00 : f32
    %179 = vector.broadcast %cst_79 : f32 to vector<2x192xf32>
    %180 = arith.addf %179, %178 : vector<2x192xf32>
    %181 = arith.divf %179, %180 : vector<2x192xf32>
    %182 = vector.extract_strided_slice %175 {offsets = [0, 192], sizes = [2, 64], strides = [1, 1]} : vector<2x256xf32> to vector<2x64xf32>
    %183 = math.tanh %182 : vector<2x64xf32>
    %184 = vector.extract_strided_slice %181 {offsets = [0, 0], sizes = [2, 64], strides = [1, 1]} : vector<2x192xf32> to vector<2x64xf32>
    %185 = vector.extract_strided_slice %181 {offsets = [0, 64], sizes = [2, 64], strides = [1, 1]} : vector<2x192xf32> to vector<2x64xf32>
    %186 = vector.extract_strided_slice %181 {offsets = [0, 128], sizes = [2, 64], strides = [1, 1]} : vector<2x192xf32> to vector<2x64xf32>
    %187 = arith.mulf %185, %157 : vector<2x64xf32>
    %188 = arith.mulf %184, %183 : vector<2x64xf32>
    %189 = arith.addf %187, %188 : vector<2x64xf32>
    %190 = math.tanh %189 : vector<2x64xf32>
    %191 = arith.mulf %186, %190 : vector<2x64xf32>
    %192 = arith.truncf %191 : vector<2x64xf32> to vector<2x64xbf16>
    %193 = arith.index_cast %c5_i32 : i32 to index
    %c0_80 = arith.constant 0 : index
    %c0_81 = arith.constant 0 : index
    %194 = vector.load %arg6[%193, %c0_80, %c0_81] : memref<8x2x64xbf16, #tpu.memory_space<vmem>>, vector<1x2x64xbf16>
    %195 = vector.shape_cast %194 : vector<1x2x64xbf16> to vector<2x64xbf16>
    %196 = vector.shape_cast %192 : vector<2x64xbf16> to vector<1x2x64xbf16>
    tpu.vector_store %arg6[%193, %c0_80, %c0_81], %196 {strides = array<i32>} : memref<8x2x64xbf16, #tpu.memory_space<vmem>>, vector<1x2x64xbf16>,
    %c6_i32 = arith.constant 6 : i32
    %197 = arith.index_cast %c6_i32 : i32 to index
    %c0_82 = arith.constant 0 : index
    %c0_83 = arith.constant 0 : index
    %198 = vector.load %arg2[%197, %c0_82, %c0_83] : memref<8x2x29xbf16, #tpu.memory_space<vmem>>, vector<1x2x29xbf16>
    %199 = vector.shape_cast %198 : vector<1x2x29xbf16> to vector<2x29xbf16>
    %c0_84 = arith.constant 0 : index
    %c0_85 = arith.constant 0 : index
    %200 = vector.load %arg3[%c0_84, %c0_85] : memref<29x256xbf16, #tpu.memory_space<vmem>>, vector<29x256xbf16>
    %cst_86 = arith.constant dense<0.000000e+00> : vector<2x256xf32>
    %201 = tpu.matmul %199, %200, %cst_86 {dimension_numbers = #tpu.dot_dimension_numbers<[1], [0], [0], [1], [0, 0, 1, 1], [], []>} : vector<2x29xbf16>, vector<29x256xbf16>, vector<2x256xf32> -> vector<2x256xf32>
    %c0_87 = arith.constant 0 : index
    %c0_88 = arith.constant 0 : index
    %202 = vector.load %arg5[%c0_87, %c0_88] : memref<1x256xf32, #tpu.memory_space<vmem>>, vector<1x256xf32>
    %203 = vector.broadcast %202 : vector<1x256xf32> to vector<2x256xf32>
    %204 = arith.addf %201, %203 : vector<2x256xf32>
    %c0_89 = arith.constant 0 : index
    %c0_90 = arith.constant 0 : index
    %205 = vector.load %arg4[%c0_89, %c0_90] : memref<64x256xbf16, #tpu.memory_space<vmem>>, vector<64x256xbf16>
    %cst_91 = arith.constant dense<0.000000e+00> : vector<2x256xf32>
    %206 = tpu.matmul %192, %205, %cst_91 {dimension_numbers = #tpu.dot_dimension_numbers<[1], [0], [0], [1], [0, 0, 1, 1], [], []>} : vector<2x64xbf16>, vector<64x256xbf16>, vector<2x256xf32> -> vector<2x256xf32>
    %207 = arith.addf %204, %206 : vector<2x256xf32>
    %208 = vector.extract_strided_slice %207 {offsets = [0, 0], sizes = [2, 192], strides = [1, 1]} : vector<2x256xf32> to vector<2x192xf32>
    %209 = arith.negf %208 : vector<2x192xf32>
    %210 = math.exp %209 : vector<2x192xf32>
    %cst_92 = arith.constant 1.000000e+00 : f32
    %211 = vector.broadcast %cst_92 : f32 to vector<2x192xf32>
    %212 = arith.addf %211, %210 : vector<2x192xf32>
    %213 = arith.divf %211, %212 : vector<2x192xf32>
    %214 = vector.extract_strided_slice %207 {offsets = [0, 192], sizes = [2, 64], strides = [1, 1]} : vector<2x256xf32> to vector<2x64xf32>
    %215 = math.tanh %214 : vector<2x64xf32>
    %216 = vector.extract_strided_slice %213 {offsets = [0, 0], sizes = [2, 64], strides = [1, 1]} : vector<2x192xf32> to vector<2x64xf32>
    %217 = vector.extract_strided_slice %213 {offsets = [0, 64], sizes = [2, 64], strides = [1, 1]} : vector<2x192xf32> to vector<2x64xf32>
    %218 = vector.extract_strided_slice %213 {offsets = [0, 128], sizes = [2, 64], strides = [1, 1]} : vector<2x192xf32> to vector<2x64xf32>
    %219 = arith.mulf %217, %189 : vector<2x64xf32>
    %220 = arith.mulf %216, %215 : vector<2x64xf32>
    %221 = arith.addf %219, %220 : vector<2x64xf32>
    %222 = math.tanh %221 : vector<2x64xf32>
    %223 = arith.mulf %218, %222 : vector<2x64xf32>
    %224 = arith.truncf %223 : vector<2x64xf32> to vector<2x64xbf16>
    %225 = arith.index_cast %c6_i32 : i32 to index
    %c0_93 = arith.constant 0 : index
    %c0_94 = arith.constant 0 : index
    %226 = vector.load %arg6[%225, %c0_93, %c0_94] : memref<8x2x64xbf16, #tpu.memory_space<vmem>>, vector<1x2x64xbf16>
    %227 = vector.shape_cast %226 : vector<1x2x64xbf16> to vector<2x64xbf16>
    %228 = vector.shape_cast %224 : vector<2x64xbf16> to vector<1x2x64xbf16>
    tpu.vector_store %arg6[%225, %c0_93, %c0_94], %228 {strides = array<i32>} : memref<8x2x64xbf16, #tpu.memory_space<vmem>>, vector<1x2x64xbf16>,
    %c7_i32 = arith.constant 7 : i32
    %229 = arith.index_cast %c7_i32 : i32 to index
    %c0_95 = arith.constant 0 : index
    %c0_96 = arith.constant 0 : index
    %230 = vector.load %arg2[%229, %c0_95, %c0_96] : memref<8x2x29xbf16, #tpu.memory_space<vmem>>, vector<1x2x29xbf16>
    %231 = vector.shape_cast %230 : vector<1x2x29xbf16> to vector<2x29xbf16>
    %c0_97 = arith.constant 0 : index
    %c0_98 = arith.constant 0 : index
    %232 = vector.load %arg3[%c0_97, %c0_98] : memref<29x256xbf16, #tpu.memory_space<vmem>>, vector<29x256xbf16>
    %cst_99 = arith.constant dense<0.000000e+00> : vector<2x256xf32>
    %233 = tpu.matmul %231, %232, %cst_99 {dimension_numbers = #tpu.dot_dimension_numbers<[1], [0], [0], [1], [0, 0, 1, 1], [], []>} : vector<2x29xbf16>, vector<29x256xbf16>, vector<2x256xf32> -> vector<2x256xf32>
    %c0_100 = arith.constant 0 : index
    %c0_101 = arith.constant 0 : index
    %234 = vector.load %arg5[%c0_100, %c0_101] : memref<1x256xf32, #tpu.memory_space<vmem>>, vector<1x256xf32>
    %235 = vector.broadcast %234 : vector<1x256xf32> to vector<2x256xf32>
    %236 = arith.addf %233, %235 : vector<2x256xf32>
    %c0_102 = arith.constant 0 : index
    %c0_103 = arith.constant 0 : index
    %237 = vector.load %arg4[%c0_102, %c0_103] : memref<64x256xbf16, #tpu.memory_space<vmem>>, vector<64x256xbf16>
    %cst_104 = arith.constant dense<0.000000e+00> : vector<2x256xf32>
    %238 = tpu.matmul %224, %237, %cst_104 {dimension_numbers = #tpu.dot_dimension_numbers<[1], [0], [0], [1], [0, 0, 1, 1], [], []>} : vector<2x64xbf16>, vector<64x256xbf16>, vector<2x256xf32> -> vector<2x256xf32>
    %239 = arith.addf %236, %238 : vector<2x256xf32>
    %240 = vector.extract_strided_slice %239 {offsets = [0, 0], sizes = [2, 192], strides = [1, 1]} : vector<2x256xf32> to vector<2x192xf32>
    %241 = arith.negf %240 : vector<2x192xf32>
    %242 = math.exp %241 : vector<2x192xf32>
    %cst_105 = arith.constant 1.000000e+00 : f32
    %243 = vector.broadcast %cst_105 : f32 to vector<2x192xf32>
    %244 = arith.addf %243, %242 : vector<2x192xf32>
    %245 = arith.divf %243, %244 : vector<2x192xf32>
    %246 = vector.extract_strided_slice %239 {offsets = [0, 192], sizes = [2, 64], strides = [1, 1]} : vector<2x256xf32> to vector<2x64xf32>
    %247 = math.tanh %246 : vector<2x64xf32>
    %248 = vector.extract_strided_slice %245 {offsets = [0, 0], sizes = [2, 64], strides = [1, 1]} : vector<2x192xf32> to vector<2x64xf32>
    %249 = vector.extract_strided_slice %245 {offsets = [0, 64], sizes = [2, 64], strides = [1, 1]} : vector<2x192xf32> to vector<2x64xf32>
    %250 = vector.extract_strided_slice %245 {offsets = [0, 128], sizes = [2, 64], strides = [1, 1]} : vector<2x192xf32> to vector<2x64xf32>
    %251 = arith.mulf %249, %221 : vector<2x64xf32>
    %252 = arith.mulf %248, %247 : vector<2x64xf32>
    %253 = arith.addf %251, %252 : vector<2x64xf32>
    %254 = math.tanh %253 : vector<2x64xf32>
    %255 = arith.mulf %250, %254 : vector<2x64xf32>
    %256 = arith.truncf %255 : vector<2x64xf32> to vector<2x64xbf16>
    %257 = arith.index_cast %c7_i32 : i32 to index
    %c0_106 = arith.constant 0 : index
    %c0_107 = arith.constant 0 : index
    %258 = vector.load %arg6[%257, %c0_106, %c0_107] : memref<8x2x64xbf16, #tpu.memory_space<vmem>>, vector<1x2x64xbf16>
    %259 = vector.shape_cast %258 : vector<1x2x64xbf16> to vector<2x64xbf16>
    %260 = vector.shape_cast %256 : vector<2x64xbf16> to vector<1x2x64xbf16>
    tpu.vector_store %arg6[%257, %c0_106, %c0_107], %260 {strides = array<i32>} : memref<8x2x64xbf16, #tpu.memory_space<vmem>>, vector<1x2x64xbf16>,
    %c8_i32 = arith.constant 8 : i32
    %c0_108 = arith.constant 0 : index
    %c0_109 = arith.constant 0 : index
    %261 = vector.load %arg7[%c0_108, %c0_109] : memref<2x64xbf16, #tpu.memory_space<vmem>>, vector<2x64xbf16>
    tpu.vector_store %arg7[%c0_108, %c0_109], %256 {strides = array<i32>} : memref<2x64xbf16, #tpu.memory_space<vmem>>, vector<2x64xbf16>,
    %c0_110 = arith.constant 0 : index
    %c0_111 = arith.constant 0 : index
    %262 = vector.load %arg8[%c0_110, %c0_111] : memref<2x64xf32, #tpu.memory_space<vmem>>, vector<2x64xf32>
    tpu.vector_store %arg8[%c0_110, %c0_111], %253 {strides = array<i32>} : memref<2x64xf32, #tpu.memory_space<vmem>>, vector<2x64xf32>,
    return
  }
  func.func @transform_0(%arg0: i32, %arg1: i32) -> (i32, i32, i32) {
    %c0_i32 = arith.constant 0 : i32
    %c0_i32_0 = arith.constant 0 : i32
    return %arg1, %arg0, %c0_i32 : i32, i32, i32
  }
  func.func @transform_1(%arg0: i32, %arg1: i32) -> (i32, i32) {
    %c0_i32 = arith.constant 0 : i32
    %c0_i32_0 = arith.constant 0 : i32
    %c0_i32_1 = arith.constant 0 : i32
    return %c0_i32, %c0_i32_0 : i32, i32
  }
  func.func @transform_2(%arg0: i32, %arg1: i32) -> (i32, i32) {
    %c0_i32 = arith.constant 0 : i32
    %c0_i32_0 = arith.constant 0 : i32
    %c0_i32_1 = arith.constant 0 : i32
    return %c0_i32, %c0_i32_0 : i32, i32
  }
  func.func @transform_3(%arg0: i32, %arg1: i32) -> (i32, i32) {
    %c0_i32 = arith.constant 0 : i32
    %c0_i32_0 = arith.constant 0 : i32
    %c0_i32_1 = arith.constant 0 : i32
    return %c0_i32, %c0_i32_0 : i32, i32
  }
  func.func @transform_4(%arg0: i32, %arg1: i32) -> (i32, i32, i32) {
    %c0_i32 = arith.constant 0 : i32
    %c0_i32_0 = arith.constant 0 : i32
    return %arg1, %arg0, %c0_i32 : i32, i32, i32
  }
}

</mosaic_0001>

<llo_original>
// kernel: lstm_forward.1
$region0: #{lstm_forward.1}
  #allocation0 [shape = 'u32[]', space=smem, size = 0x4, offset = 0x4, fixed_abs, tag = 'smem constant byte address 0x4 - core index']
  #allocation1 [shape = 'u32[144,128]{1,0:T(1,128)}', space=vmem, size = 0x12000, scoped, tag = 'internal scratch']
  #allocation2 [shape = 'bf16[2,64]{1,0:T(2,128)(2,1)}', space=vmem, size = 0x200, scoped, tag = 'scratch operand']
  #allocation3 [shape = 'f32[2,64]{1,0:T(2,128)}', space=vmem, size = 0x400, scoped, tag = 'scratch operand']
  %s0 = inlined_call_operand.vmem [shape: bf16[8,2,29], index: 0, kind: input, shape index: {}]
  %s1 = inlined_call_operand.vmem [shape: bf16[29,256], index: 1, kind: input, shape index: {}]
  %s2 = inlined_call_operand.vmem [shape: bf16[64,256], index: 2, kind: input, shape index: {}]
  %s3 = inlined_call_operand.vmem [shape: f32[1,256], index: 3, kind: input, shape index: {}]
  %s4 = inlined_call_operand.vmem [shape: bf16[8,2,64], index: 4, kind: output, shape index: {}]
  %s5 = sld [smem:[#allocation0]]
  $region30: #{lstm_forward.1} parent=0
    _
  %s7 = ssub.s32 1, %s5
  %s8 = scalar_select 0, %s7, %s5
  // Predicated region
  $region2: #{lstm_forward.1} parent=0 // pred_check
    _
  $region3: #{lstm_forward.1} parent=0 // pred_check_branch
    %10 = sbr.rel (0) target = $region5
  $region4: #{lstm_forward.1} parent=0 // pred_region
    _
  $region5: #{lstm_forward.1} parent=0 // pred_fallthru
    _
  // Predicated region
  $region6: #{lstm_forward.1} parent=0 // pred_check
    _
  $region7: #{lstm_forward.1} parent=0 // pred_check_branch
    %12 = sbr.rel (0) target = $region9
  $region8: #{lstm_forward.1} parent=0 // pred_region
    _
  $region9: #{lstm_forward.1} parent=0 // pred_fallthru
    _
  // Predicated region
  $region10: #{lstm_forward.1} parent=0 // pred_check
    _
  $region11: #{lstm_forward.1} parent=0 // pred_check_branch
    %14 = sbr.rel (0) target = $region13
  $region12: #{lstm_forward.1} parent=0 // pred_region
    _
  $region13: #{lstm_forward.1} parent=0 // pred_fallthru
    _
  // Predicated region
  $region14: #{lstm_forward.1} parent=0 // pred_check
    _
  $region15: #{lstm_forward.1} parent=0 // pred_check_branch
    %16 = sbr.rel (0) target = $region17
  $region16: #{lstm_forward.1} parent=0 // pred_region
    _
  $region17: #{lstm_forward.1} parent=0 // pred_fallthru
    _
  %p18 = scmp.eq.s32.totalorder 0, 0
  // Predicated region
  $region18: #{lstm_forward.1} parent=0 // pred_check
    %p19 = pneg %p18
  $region19: #{lstm_forward.1} parent=0 // pred_check_branch
    %21 = sbr.rel (%p19) target = $region21
  $region20: #{lstm_forward.1} parent=0 // pred_region
    %vm22 = vcmask 516096
    %23 = vst.msk [vmem:[#allocation2] sm:$0x1] %vm22, 0
    %vm24 = vcmask 517120
    %25 = vst.msk [vmem:[#allocation3] sm:$0x3] %vm24, 0.0
  $region21: #{lstm_forward.1} parent=0 // pred_fallthru
    _
  %v26 = vld [vmem:[#allocation2] sm:$0x1]
  %v27 = vld [vmem:[#allocation3] sm:$0x3]
  %v28 = vld [vmem:[%s0] sm:$0x1]
  %v29 = vld [vmem:[%s1] sm:$0xff]
  %v30 = vld [vmem:[%s1 + $0x8] sm:$0xff]
  %v31 = vld [vmem:[%s1 + $0x10] sm:$0xff]
  %v32 = vld [vmem:[%s1 + $0x18] sm:$0x77]
  %v33 = vld [vmem:[%s3] sm:$0x3]
  %v35 = vlaneseq
  %v36 = vshrl.u32 %v35, 7
  %v37 = vsub.s32 0, %v36
  %v38 = vrot.slane %v33, %v37
  %v39 = vlaneseq
  %v40 = vshrl.u32 %v39, 7
  %v41 = vsub.s32 1, %v40
  %v42 = vrot.slane %v33, %v41
  %v49 = vunpack.c.l.b16 %v29
  %v50 = vunpack.c.h.b16 %v29
  %v51 = vunpack.c.l.b16 %v30
  %v52 = vunpack.c.h.b16 %v30
  %v53 = vunpack.c.l.b16 %v31
  %v54 = vunpack.c.h.b16 %v31
  %v55 = vunpack.c.l.b16 %v32
  %v56 = vunpack.c.h.b16 %v32
  %v57 = vpack.c.b16 %v51, %v49
  %v58 = vpack.c.b16 %v52, %v50
  %v59 = vpack.c.b16 %v55, %v53
  %v60 = vpack.c.b16 %v56, %v54
  %vm63 = vcmask 236544
  %v65 = vsel %vm63, %v28, 0
  %vm67 = vcmask 1045504
  %vm68 = vcmask 1046528
  %v69 = vsel %vm67, 4294967295, 65535
  %v70 = vsel %vm68, %v69, 0
  %v72 = vand.u32 %v59, %v70
  %v75 = vand.u32 %v60, %v70
  %77 = vmatprep.subr.bf16.mxu0 0
  %78 = vmatpush1.bf16.msra.mxu0 0
  %79 = vmatprep.subr.bf16.mxu0 0
  %80 = vmatpush1.bf16.msra.mxu0 0
  %81 = vmatprep.subr.bf16.mxu0 0
  %82 = vmatpush1.bf16.msra.mxu0 0
  %83 = vmatprep.subr.bf16.mxu0 0
  %84 = vmatpush1.bf16.msra.mxu0 0
  %85 = vmatprep.subr.bf16.mxu0 0
  %86 = vmatpush1.bf16.msra.mxu0 0
  %87 = vmatprep.subr.bf16.mxu0 0
  %88 = vmatpush1.bf16.msra.mxu0 0
  %89 = vmatprep.subr.bf16.mxu0 %v75
  %90 = vmatpush1.bf16.msra.mxu0 %v72
  %91 = vmatprep.subr.bf16.mxu0 %v58
  %92 = vmatpush1.bf16.msra.mxu0 %v57
  %93 = vmatprep.subr.bf16.mxu0 0
  %94 = vmatpush2.bf16.msra.mxu0 0
  %95 = vmatprep.subr.bf16.mxu0 0
  %96 = vmatpush2.bf16.msra.mxu0 0
  %97 = vmatprep.subr.bf16.mxu0 0
  %98 = vmatpush2.bf16.msra.mxu0 0
  %99 = vmatprep.subr.bf16.mxu0 0
  %100 = vmatpush2.bf16.msra.mxu0 0
  %101 = vmatprep.subr.bf16.mxu0 0
  %102 = vmatpush2.bf16.msra.mxu0 0
  %103 = vmatprep.subr.bf16.mxu0 0
  %104 = vmatpush2.bf16.msra.mxu0 0
  %105 = vmatprep.subr.bf16.mxu0 0
  %106 = vmatpush2.bf16.msra.mxu0 0
  %107 = vmatprep.subr.bf16.mxu0 0
  %108 = vmatpush2.bf16.msra.mxu0 0
  %109 = vmatprep.mubr.bf16.mxu0 0
  %110 = vmatmul.mubr.bf16.gmra.mxu0 %v65
  %v111 = vpop.f32.mrf.mxu0
  %v112 = vadd.f32 %v38, %v111
  %v113 = vpop.f32.mrf.mxu0
  %v114 = vadd.f32 %v42, %v113
  %v115 = vpop.f32.mrf.mxu0
  %v116 = vpop.f32.mrf.mxu0
  %117 = vdwg.mxu0
  %v118 = vld [vmem:[%s2] sm:$0xff]
  %v119 = vld [vmem:[%s2 + $0x8] sm:$0xff]
  %v120 = vld [vmem:[%s2 + $0x10] sm:$0xff]
  %v121 = vld [vmem:[%s2 + $0x18] sm:$0xff]
  %v122 = vld [vmem:[%s2 + $0x20] sm:$0xff]
  %v123 = vld [vmem:[%s2 + $0x28] sm:$0xff]
  %v124 = vld [vmem:[%s2 + $0x30] sm:$0xff]
  %v125 = vld [vmem:[%s2 + $0x38] sm:$0xff]
  %v134 = vunpack.c.l.b16 %v118
  %v135 = vunpack.c.h.b16 %v118
  %v136 = vunpack.c.l.b16 %v119
  %v137 = vunpack.c.h.b16 %v119
  %v138 = vunpack.c.l.b16 %v120
  %v139 = vunpack.c.h.b16 %v120
  %v140 = vunpack.c.l.b16 %v121
  %v141 = vunpack.c.h.b16 %v121
  %v142 = vunpack.c.l.b16 %v122
  %v143 = vunpack.c.h.b16 %v122
  %v144 = vunpack.c.l.b16 %v123
  %v145 = vunpack.c.h.b16 %v123
  %v146 = vunpack.c.l.b16 %v124
  %v147 = vunpack.c.h.b16 %v124
  %v148 = vunpack.c.l.b16 %v125
  %v149 = vunpack.c.h.b16 %v125
  %v150 = vpack.c.b16 %v136, %v134
  %v151 = vpack.c.b16 %v137, %v135
  %v152 = vpack.c.b16 %v140, %v138
  %v153 = vpack.c.b16 %v141, %v139
  %v154 = vpack.c.b16 %v144, %v142
  %v155 = vpack.c.b16 %v145, %v143
  %v156 = vpack.c.b16 %v148, %v146
  %v157 = vpack.c.b16 %v149, %v147
  %vm166 = vcmask 523264
  %v168 = vsel %vm166, %v26, 0
  %170 = vmatprep.subr.bf16.mxu0 0
  %171 = vmatpush1.bf16.msra.mxu0 0
  %172 = vmatprep.subr.bf16.mxu0 0
  %173 = vmatpush1.bf16.msra.mxu0 0
  %174 = vmatprep.subr.bf16.mxu0 0
  %175 = vmatpush1.bf16.msra.mxu0 0
  %176 = vmatprep.subr.bf16.mxu0 0
  %177 = vmatpush1.bf16.msra.mxu0 0
  %178 = vmatprep.subr.bf16.mxu0 %v157
  %179 = vmatpush1.bf16.msra.mxu0 %v156
  %180 = vmatprep.subr.bf16.mxu0 %v155
  %181 = vmatpush1.bf16.msra.mxu0 %v154
  %182 = vmatprep.subr.bf16.mxu0 %v153
  %183 = vmatpush1.bf16.msra.mxu0 %v152
  %184 = vmatprep.subr.bf16.mxu0 %v151
  %185 = vmatpush1.bf16.msra.mxu0 %v150
  %186 = vmatprep.subr.bf16.mxu0 0
  %187 = vmatpush2.bf16.msra.mxu0 0
  %188 = vmatprep.subr.bf16.mxu0 0
  %189 = vmatpush2.bf16.msra.mxu0 0
  %190 = vmatprep.subr.bf16.mxu0 0
  %191 = vmatpush2.bf16.msra.mxu0 0
  %192 = vmatprep.subr.bf16.mxu0 0
  %193 = vmatpush2.bf16.msra.mxu0 0
  %194 = vmatprep.subr.bf16.mxu0 0
  %195 = vmatpush2.bf16.msra.mxu0 0
  %196 = vmatprep.subr.bf16.mxu0 0
  %197 = vmatpush2.bf16.msra.mxu0 0
  %198 = vmatprep.subr.bf16.mxu0 0
  %199 = vmatpush2.bf16.msra.mxu0 0
  %200 = vmatprep.subr.bf16.mxu0 0
  %201 = vmatpush2.bf16.msra.mxu0 0
  %202 = vmatprep.mubr.bf16.mxu0 0
  %203 = vmatmul.mubr.bf16.gmra.mxu0 %v168
  %v204 = vpop.f32.mrf.mxu0
  %v205 = vadd.f32 0.0, %v204
  %v206 = vpop.f32.mrf.mxu0
  %v207 = vadd.f32 0.0, %v206
  %v208 = vpop.f32.mrf.mxu0
  %v209 = vpop.f32.mrf.mxu0
  %210 = vdwg.mxu0
  %v211 = vadd.f32 %v112, %v205
  %v212 = vadd.f32 %v114, %v207
  %v213 = vxor.u32 %v211, 2147483648
  %v214 = vxor.u32 %v212, 2147483648
  %v215 = vmul.f32 %v213, 1.442695
  %v216 = vpow.pop %v215
  %v217 = vmul.f32 %v214, 1.442695
  %v218 = vpow.pop %v217
  %v219 = vadd.f32 %v216, 1.0
  %v220 = vadd.f32 %v218, 1.0
  %v221 = vrcp.pop %v219
  %v222 = vmul.f32 1.0, %v221
  %v223 = vrcp.pop %v220
  %v224 = vmul.f32 1.0, %v223
  %v225 = vtanh.pop %v212
  %227 = vrot.lane.b32.xlu0 %v27, 64
  %v228 = vpop.permute.xlu0 %227
  %v230 = vmul.f32 %v222, %v228
  %232 = vrot.lane.b32.xlu0 %v225, 64
  %v233 = vpop.permute.xlu0 %232
  %v235 = vmul.f32 %v222, %v233
  %237 = vrot.lane.b32.xlu0 %v235, 64
  %v238 = vpop.permute.xlu0 %237
  %v240 = vadd.f32 %v230, %v238
  %v241 = vtanh.pop %v240
  %243 = vrot.lane.b32.xlu0 %v241, 64
  %v244 = vpop.permute.xlu0 %243
  %v246 = vmul.f32 %v224, %v244
  %v247 = vpack.c.bf16 %v246, %v246
  %vm248 = vcmask 516096
  %249 = vst.msk [vmem:[%s4] sm:$0x1] %vm248, %v247
  %s250 = scalar_lea.vmem %s0, 1
  %v251 = vld [vmem:[%s250] sm:$0x1]
  %v252 = vld [vmem:[%s1] sm:$0xff]
  %v253 = vld [vmem:[%s1 + $0x8] sm:$0xff]
  %v254 = vld [vmem:[%s1 + $0x10] sm:$0xff]
  %v255 = vld [vmem:[%s1 + $0x18] sm:$0x77]
  %v256 = vld [vmem:[%s3] sm:$0x3]
  %v258 = vlaneseq
  %v259 = vshrl.u32 %v258, 7
  %v260 = vsub.s32 0, %v259
  %v261 = vrot.slane %v256, %v260
  %v262 = vlaneseq
  %v263 = vshrl.u32 %v262, 7
  %v264 = vsub.s32 1, %v263
  %v265 = vrot.slane %v256, %v264
  %v272 = vunpack.c.l.b16 %v252
  %v273 = vunpack.c.h.b16 %v252
  %v274 = vunpack.c.l.b16 %v253
  %v275 = vunpack.c.h.b16 %v253
  %v276 = vunpack.c.l.b16 %v254
  %v277 = vunpack.c.h.b16 %v254
  %v278 = vunpack.c.l.b16 %v255
  %v279 = vunpack.c.h.b16 %v255
  %v280 = vpack.c.b16 %v274, %v272
  %v281 = vpack.c.b16 %v275, %v273
  %v282 = vpack.c.b16 %v278, %v276
  %v283 = vpack.c.b16 %v279, %v277
  %v287 = vsel %vm63, %v251, 0
  %v290 = vand.u32 %v282, %v70
  %v293 = vand.u32 %v283, %v70
  %295 = vmatprep.subr.bf16.mxu0 0
  %296 = vmatpush1.bf16.msra.mxu0 0
  %297 = vmatprep.subr.bf16.mxu0 0
  %298 = vmatpush1.bf16.msra.mxu0 0
  %299 = vmatprep.subr.bf16.mxu0 0
  %300 = vmatpush1.bf16.msra.mxu0 0
  %301 = vmatprep.subr.bf16.mxu0 0
  %302 = vmatpush1.bf16.msra.mxu0 0
  %303 = vmatprep.subr.bf16.mxu0 0
  %304 = vmatpush1.bf16.msra.mxu0 0
  %305 = vmatprep.subr.bf16.mxu0 0
  %306 = vmatpush1.bf16.msra.mxu0 0
  %307 = vmatprep.subr.bf16.mxu0 %v293
  %308 = vmatpush1.bf16.msra.mxu0 %v290
  %309 = vmatprep.subr.bf16.mxu0 %v281
  %310 = vmatpush1.bf16.msra.mxu0 %v280
  %311 = vmatprep.subr.bf16.mxu0 0
  %312 = vmatpush2.bf16.msra.mxu0 0
  %313 = vmatprep.subr.bf16.mxu0 0
  %314 = vmatpush2.bf16.msra.mxu0 0
  %315 = vmatprep.subr.bf16.mxu0 0
  %316 = vmatpush2.bf16.msra.mxu0 0
  %317 = vmatprep.subr.bf16.mxu0 0
  %318 = vmatpush2.bf16.msra.mxu0 0
  %319 = vmatprep.subr.bf16.mxu0 0
  %320 = vmatpush2.bf16.msra.mxu0 0
  %321 = vmatprep.subr.bf16.mxu0 0
  %322 = vmatpush2.bf16.msra.mxu0 0
  %323 = vmatprep.subr.bf16.mxu0 0
  %324 = vmatpush2.bf16.msra.mxu0 0
  %325 = vmatprep.subr.bf16.mxu0 0
  %326 = vmatpush2.bf16.msra.mxu0 0
  %327 = vmatprep.mubr.bf16.mxu0 0
  %328 = vmatmul.mubr.bf16.gmra.mxu0 %v287
  %v329 = vpop.f32.mrf.mxu0
  %v330 = vadd.f32 %v261, %v329
  %v331 = vpop.f32.mrf.mxu0
  %v332 = vadd.f32 %v265, %v331
  %v333 = vpop.f32.mrf.mxu0
  %v334 = vpop.f32.mrf.mxu0
  %335 = vdwg.mxu0
  %v336 = vld [vmem:[%s2] sm:$0xff]
  %v337 = vld [vmem:[%s2 + $0x8] sm:$0xff]
  %v338 = vld [vmem:[%s2 + $0x10] sm:$0xff]
  %v339 = vld [vmem:[%s2 + $0x18] sm:$0xff]
  %v340 = vld [vmem:[%s2 + $0x20] sm:$0xff]
  %v341 = vld [vmem:[%s2 + $0x28] sm:$0xff]
  %v342 = vld [vmem:[%s2 + $0x30] sm:$0xff]
  %v343 = vld [vmem:[%s2 + $0x38] sm:$0xff]
  %v352 = vunpack.c.l.b16 %v336
  %v353 = vunpack.c.h.b16 %v336
  %v354 = vunpack.c.l.b16 %v337
  %v355 = vunpack.c.h.b16 %v337
  %v356 = vunpack.c.l.b16 %v338
  %v357 = vunpack.c.h.b16 %v338
  %v358 = vunpack.c.l.b16 %v339
  %v359 = vunpack.c.h.b16 %v339
  %v360 = vunpack.c.l.b16 %v340
  %v361 = vunpack.c.h.b16 %v340
  %v362 = vunpack.c.l.b16 %v341
  %v363 = vunpack.c.h.b16 %v341
  %v364 = vunpack.c.l.b16 %v342
  %v365 = vunpack.c.h.b16 %v342
  %v366 = vunpack.c.l.b16 %v343
  %v367 = vunpack.c.h.b16 %v343
  %v368 = vpack.c.b16 %v354, %v352
  %v369 = vpack.c.b16 %v355, %v353
  %v370 = vpack.c.b16 %v358, %v356
  %v371 = vpack.c.b16 %v359, %v357
  %v372 = vpack.c.b16 %v362, %v360
  %v373 = vpack.c.b16 %v363, %v361
  %v374 = vpack.c.b16 %v366, %v364
  %v375 = vpack.c.b16 %v367, %v365
  %v385 = vsel %vm166, %v247, 0
  %387 = vmatprep.subr.bf16.mxu0 0
  %388 = vmatpush1.bf16.msra.mxu0 0
  %389 = vmatprep.subr.bf16.mxu0 0
  %390 = vmatpush1.bf16.msra.mxu0 0
  %391 = vmatprep.subr.bf16.mxu0 0
  %392 = vmatpush1.bf16.msra.mxu0 0
  %393 = vmatprep.subr.bf16.mxu0 0
  %394 = vmatpush1.bf16.msra.mxu0 0
  %395 = vmatprep.subr.bf16.mxu0 %v375
  %396 = vmatpush1.bf16.msra.mxu0 %v374
  %397 = vmatprep.subr.bf16.mxu0 %v373
  %398 = vmatpush1.bf16.msra.mxu0 %v372
  %399 = vmatprep.subr.bf16.mxu0 %v371
  %400 = vmatpush1.bf16.msra.mxu0 %v370
  %401 = vmatprep.subr.bf16.mxu0 %v369
  %402 = vmatpush1.bf16.msra.mxu0 %v368
  %403 = vmatprep.subr.bf16.mxu0 0
  %404 = vmatpush2.bf16.msra.mxu0 0
  %405 = vmatprep.subr.bf16.mxu0 0
  %406 = vmatpush2.bf16.msra.mxu0 0
  %407 = vmatprep.subr.bf16.mxu0 0
  %408 = vmatpush2.bf16.msra.mxu0 0
  %409 = vmatprep.subr.bf16.mxu0 0
  %410 = vmatpush2.bf16.msra.mxu0 0
  %411 = vmatprep.subr.bf16.mxu0 0
  %412 = vmatpush2.bf16.msra.mxu0 0
  %413 = vmatprep.subr.bf16.mxu0 0
  %414 = vmatpush2.bf16.msra.mxu0 0
  %415 = vmatprep.subr.bf16.mxu0 0
  %416 = vmatpush2.bf16.msra.mxu0 0
  %417 = vmatprep.subr.bf16.mxu0 0
  %418 = vmatpush2.bf16.msra.mxu0 0
  %419 = vmatprep.mubr.bf16.mxu0 0
  %420 = vmatmul.mubr.bf16.gmra.mxu0 %v385
  %v421 = vpop.f32.mrf.mxu0
  %v422 = vadd.f32 0.0, %v421
  %v423 = vpop.f32.mrf.mxu0
  %v424 = vadd.f32 0.0, %v423
  %v425 = vpop.f32.mrf.mxu0
  %v426 = vpop.f32.mrf.mxu0
  %427 = vdwg.mxu0
  %v428 = vadd.f32 %v330, %v422
  %v429 = vadd.f32 %v332, %v424
  %v430 = vxor.u32 %v428, 2147483648
  %v431 = vxor.u32 %v429, 2147483648
  %v432 = vmul.f32 %v430, 1.442695
  %v433 = vpow.pop %v432
  %v434 = vmul.f32 %v431, 1.442695
  %v435 = vpow.pop %v434
  %v436 = vadd.f32 %v433, 1.0
  %v437 = vadd.f32 %v435, 1.0
  %v438 = vrcp.pop %v436
  %v439 = vmul.f32 1.0, %v438
  %v440 = vrcp.pop %v437
  %v441 = vmul.f32 1.0, %v440
  %v442 = vtanh.pop %v429
  %v443 = vmul.f32 %v439, %v240
  %445 = vrot.lane.b32.xlu0 %v442, 64
  %v446 = vpop.permute.xlu0 %445
  %v448 = vmul.f32 %v439, %v446
  %450 = vrot.lane.b32.xlu0 %v448, 64
  %v451 = vpop.permute.xlu0 %450
  %v453 = vadd.f32 %v443, %v451
  %v454 = vtanh.pop %v453
  %456 = vrot.lane.b32.xlu0 %v454, 64
  %v457 = vpop.permute.xlu0 %456
  %v459 = vmul.f32 %v441, %v457
  %v460 = vpack.c.bf16 %v459, %v459
  %s461 = scalar_lea.vmem %s4, 1
  %462 = vst.msk [vmem:[%s461] sm:$0x1] %vm248, %v460
  %s463 = scalar_lea.vmem %s0, 2
  %v464 = vld [vmem:[%s463] sm:$0x1]
  %v465 = vld [vmem:[%s1] sm:$0xff]
  %v466 = vld [vmem:[%s1 + $0x8] sm:$0xff]
  %v467 = vld [vmem:[%s1 + $0x10] sm:$0xff]
  %v468 = vld [vmem:[%s1 + $0x18] sm:$0x77]
  %v469 = vld [vmem:[%s3] sm:$0x3]
  %v471 = vlaneseq
  %v472 = vshrl.u32 %v471, 7
  %v473 = vsub.s32 0, %v472
  %v474 = vrot.slane %v469, %v473
  %v475 = vlaneseq
  %v476 = vshrl.u32 %v475, 7
  %v477 = vsub.s32 1, %v476
  %v478 = vrot.slane %v469, %v477
  %v485 = vunpack.c.l.b16 %v465
  %v486 = vunpack.c.h.b16 %v465
  %v487 = vunpack.c.l.b16 %v466
  %v488 = vunpack.c.h.b16 %v466
  %v489 = vunpack.c.l.b16 %v467
  %v490 = vunpack.c.h.b16 %v467
  %v491 = vunpack.c.l.b16 %v468
  %v492 = vunpack.c.h.b16 %v468
  %v493 = vpack.c.b16 %v487, %v485
  %v494 = vpack.c.b16 %v488, %v486
  %v495 = vpack.c.b16 %v491, %v489
  %v496 = vpack.c.b16 %v492, %v490
  %v500 = vsel %vm63, %v464, 0
  %v503 = vand.u32 %v495, %v70
  %v506 = vand.u32 %v496, %v70
  %508 = vmatprep.subr.bf16.mxu0 0
  %509 = vmatpush1.bf16.msra.mxu0 0
  %510 = vmatprep.subr.bf16.mxu0 0
  %511 = vmatpush1.bf16.msra.mxu0 0
  %512 = vmatprep.subr.bf16.mxu0 0
  %513 = vmatpush1.bf16.msra.mxu0 0
  %514 = vmatprep.subr.bf16.mxu0 0
  %515 = vmatpush1.bf16.msra.mxu0 0
  %516 = vmatprep.subr.bf16.mxu0 0
  %517 = vmatpush1.bf16.msra.mxu0 0
  %518 = vmatprep.subr.bf16.mxu0 0
  %519 = vmatpush1.bf16.msra.mxu0 0
  %520 = vmatprep.subr.bf16.mxu0 %v506
  %521 = vmatpush1.bf16.msra.mxu0 %v503
  %522 = vmatprep.subr.bf16.mxu0 %v494
  %523 = vmatpush1.bf16.msra.mxu0 %v493
  %524 = vmatprep.subr.bf16.mxu0 0
  %525 = vmatpush2.bf16.msra.mxu0 0
  %526 = vmatprep.subr.bf16.mxu0 0
  %527 = vmatpush2.bf16.msra.mxu0 0
  %528 = vmatprep.subr.bf16.mxu0 0
  %529 = vmatpush2.bf16.msra.mxu0 0
  %530 = vmatprep.subr.bf16.mxu0 0
  %531 = vmatpush2.bf16.msra.mxu0 0
  %532 = vmatprep.subr.bf16.mxu0 0
  %533 = vmatpush2.bf16.msra.mxu0 0
  %534 = vmatprep.subr.bf16.mxu0 0
  %535 = vmatpush2.bf16.msra.mxu0 0
  %536 = vmatprep.subr.bf16.mxu0 0
  %537 = vmatpush2.bf16.msra.mxu0 0
  %538 = vmatprep.subr.bf16.mxu0 0
  %539 = vmatpush2.bf16.msra.mxu0 0
  %540 = vmatprep.mubr.bf16.mxu0 0
  %541 = vmatmul.mubr.bf16.gmra.mxu0 %v500
  %v542 = vpop.f32.mrf.mxu0
  %v543 = vadd.f32 %v474, %v542
  %v544 = vpop.f32.mrf.mxu0
  %v545 = vadd.f32 %v478, %v544
  %v546 = vpop.f32.mrf.mxu0
  %v547 = vpop.f32.mrf.mxu0
  %548 = vdwg.mxu0
  %v549 = vld [vmem:[%s2] sm:$0xff]
  %v550 = vld [vmem:[%s2 + $0x8] sm:$0xff]
  %v551 = vld [vmem:[%s2 + $0x10] sm:$0xff]
  %v552 = vld [vmem:[%s2 + $0x18] sm:$0xff]
  %v553 = vld [vmem:[%s2 + $0x20] sm:$0xff]
  %v554 = vld [vmem:[%s2 + $0x28] sm:$0xff]
  %v555 = vld [vmem:[%s2 + $0x30] sm:$0xff]
  %v556 = vld [vmem:[%s2 + $0x38] sm:$0xff]
  %v565 = vunpack.c.l.b16 %v549
  %v566 = vunpack.c.h.b16 %v549
  %v567 = vunpack.c.l.b16 %v550
  %v568 = vunpack.c.h.b16 %v550
  %v569 = vunpack.c.l.b16 %v551
  %v570 = vunpack.c.h.b16 %v551
  %v571 = vunpack.c.l.b16 %v552
  %v572 = vunpack.c.h.b16 %v552
  %v573 = vunpack.c.l.b16 %v553
  %v574 = vunpack.c.h.b16 %v553
  %v575 = vunpack.c.l.b16 %v554
  %v576 = vunpack.c.h.b16 %v554
  %v577 = vunpack.c.l.b16 %v555
  %v578 = vunpack.c.h.b16 %v555
  %v579 = vunpack.c.l.b16 %v556
  %v580 = vunpack.c.h.b16 %v556
  %v581 = vpack.c.b16 %v567, %v565
  %v582 = vpack.c.b16 %v568, %v566
  %v583 = vpack.c.b16 %v571, %v569
  %v584 = vpack.c.b16 %v572, %v570
  %v585 = vpack.c.b16 %v575, %v573
  %v586 = vpack.c.b16 %v576, %v574
  %v587 = vpack.c.b16 %v579, %v577
  %v588 = vpack.c.b16 %v580, %v578
  %v598 = vsel %vm166, %v460, 0
  %600 = vmatprep.subr.bf16.mxu0 0
  %601 = vmatpush1.bf16.msra.mxu0 0
  %602 = vmatprep.subr.bf16.mxu0 0
  %603 = vmatpush1.bf16.msra.mxu0 0
  %604 = vmatprep.subr.bf16.mxu0 0
  %605 = vmatpush1.bf16.msra.mxu0 0
  %606 = vmatprep.subr.bf16.mxu0 0
  %607 = vmatpush1.bf16.msra.mxu0 0
  %608 = vmatprep.subr.bf16.mxu0 %v588
  %609 = vmatpush1.bf16.msra.mxu0 %v587
  %610 = vmatprep.subr.bf16.mxu0 %v586
  %611 = vmatpush1.bf16.msra.mxu0 %v585
  %612 = vmatprep.subr.bf16.mxu0 %v584
  %613 = vmatpush1.bf16.msra.mxu0 %v583
  %614 = vmatprep.subr.bf16.mxu0 %v582
  %615 = vmatpush1.bf16.msra.mxu0 %v581
  %616 = vmatprep.subr.bf16.mxu0 0
  %617 = vmatpush2.bf16.msra.mxu0 0
  %618 = vmatprep.subr.bf16.mxu0 0
  %619 = vmatpush2.bf16.msra.mxu0 0
  %620 = vmatprep.subr.bf16.mxu0 0
  %621 = vmatpush2.bf16.msra.mxu0 0
  %622 = vmatprep.subr.bf16.mxu0 0
  %623 = vmatpush2.bf16.msra.mxu0 0
  %624 = vmatprep.subr.bf16.mxu0 0
  %625 = vmatpush2.bf16.msra.mxu0 0
  %626 = vmatprep.subr.bf16.mxu0 0
  %627 = vmatpush2.bf16.msra.mxu0 0
  %628 = vmatprep.subr.bf16.mxu0 0
  %629 = vmatpush2.bf16.msra.mxu0 0
  %630 = vmatprep.subr.bf16.mxu0 0
  %631 = vmatpush2.bf16.msra.mxu0 0
  %632 = vmatprep.mubr.bf16.mxu0 0
  %633 = vmatmul.mubr.bf16.gmra.mxu0 %v598
  %v634 = vpop.f32.mrf.mxu0
  %v635 = vadd.f32 0.0, %v634
  %v636 = vpop.f32.mrf.mxu0
  %v637 = vadd.f32 0.0, %v636
  %v638 = vpop.f32.mrf.mxu0
  %v639 = vpop.f32.mrf.mxu0
  %640 = vdwg.mxu0
  %v641 = vadd.f32 %v543, %v635
  %v642 = vadd.f32 %v545, %v637
  %v643 = vxor.u32 %v641, 2147483648
  %v644 = vxor.u32 %v642, 2147483648
  %v645 = vmul.f32 %v643, 1.442695
  %v646 = vpow.pop %v645
  %v647 = vmul.f32 %v644, 1.442695
  %v648 = vpow.pop %v647
  %v649 = vadd.f32 %v646, 1.0
  %v650 = vadd.f32 %v648, 1.0
  %v651 = vrcp.pop %v649
  %v652 = vmul.f32 1.0, %v651
  %v653 = vrcp.pop %v650
  %v654 = vmul.f32 1.0, %v653
  %v655 = vtanh.pop %v642
  %v656 = vmul.f32 %v652, %v453
  %658 = vrot.lane.b32.xlu0 %v655, 64
  %v659 = vpop.permute.xlu0 %658
  %v661 = vmul.f32 %v652, %v659
  %663 = vrot.lane.b32.xlu0 %v661, 64
  %v664 = vpop.permute.xlu0 %663
  %v666 = vadd.f32 %v656, %v664
  %v667 = vtanh.pop %v666
  %669 = vrot.lane.b32.xlu0 %v667, 64
  %v670 = vpop.permute.xlu0 %669
  %v672 = vmul.f32 %v654, %v670
  %v673 = vpack.c.bf16 %v672, %v672
  %s674 = scalar_lea.vmem %s4, 2
  %675 = vst.msk [vmem:[%s674] sm:$0x1] %vm248, %v673
  %s676 = scalar_lea.vmem %s0, 3
  %v677 = vld [vmem:[%s676] sm:$0x1]
  %v678 = vld [vmem:[%s1] sm:$0xff]
  %v679 = vld [vmem:[%s1 + $0x8] sm:$0xff]
  %v680 = vld [vmem:[%s1 + $0x10] sm:$0xff]
  %v681 = vld [vmem:[%s1 + $0x18] sm:$0x77]
  %v682 = vld [vmem:[%s3] sm:$0x3]
  %v684 = vlaneseq
  %v685 = vshrl.u32 %v684, 7
  %v686 = vsub.s32 0, %v685
  %v687 = vrot.slane %v682, %v686
  %v688 = vlaneseq
  %v689 = vshrl.u32 %v688, 7
  %v690 = vsub.s32 1, %v689
  %v691 = vrot.slane %v682, %v690
  %v698 = vunpack.c.l.b16 %v678
  %v699 = vunpack.c.h.b16 %v678
  %v700 = vunpack.c.l.b16 %v679
  %v701 = vunpack.c.h.b16 %v679
  %v702 = vunpack.c.l.b16 %v680
  %v703 = vunpack.c.h.b16 %v680
  %v704 = vunpack.c.l.b16 %v681
  %v705 = vunpack.c.h.b16 %v681
  %v706 = vpack.c.b16 %v700, %v698
  %v707 = vpack.c.b16 %v701, %v699
  %v708 = vpack.c.b16 %v704, %v702
  %v709 = vpack.c.b16 %v705, %v703
  %v713 = vsel %vm63, %v677, 0
  %v716 = vand.u32 %v708, %v70
  %v719 = vand.u32 %v709, %v70
  %721 = vmatprep.subr.bf16.mxu0 0
  %722 = vmatpush1.bf16.msra.mxu0 0
  %723 = vmatprep.subr.bf16.mxu0 0
  %724 = vmatpush1.bf16.msra.mxu0 0
  %725 = vmatprep.subr.bf16.mxu0 0
  %726 = vmatpush1.bf16.msra.mxu0 0
  %727 = vmatprep.subr.bf16.mxu0 0
  %728 = vmatpush1.bf16.msra.mxu0 0
  %729 = vmatprep.subr.bf16.mxu0 0
  %730 = vmatpush1.bf16.msra.mxu0 0
  %731 = vmatprep.subr.bf16.mxu0 0
  %732 = vmatpush1.bf16.msra.mxu0 0
  %733 = vmatprep.subr.bf16.mxu0 %v719
  %734 = vmatpush1.bf16.msra.mxu0 %v716
  %735 = vmatprep.subr.bf16.mxu0 %v707
  %736 = vmatpush1.bf16.msra.mxu0 %v706
  %737 = vmatprep.subr.bf16.mxu0 0
  %738 = vmatpush2.bf16.msra.mxu0 0
  %739 = vmatprep.subr.bf16.mxu0 0
  %740 = vmatpush2.bf16.msra.mxu0 0
  %741 = vmatprep.subr.bf16.mxu0 0
  %742 = vmatpush2.bf16.msra.mxu0 0
  %743 = vmatprep.subr.bf16.mxu0 0
  %744 = vmatpush2.bf16.msra.mxu0 0
  %745 = vmatprep.subr.bf16.mxu0 0
  %746 = vmatpush2.bf16.msra.mxu0 0
  %747 = vmatprep.subr.bf16.mxu0 0
  %748 = vmatpush2.bf16.msra.mxu0 0
  %749 = vmatprep.subr.bf16.mxu0 0
  %750 = vmatpush2.bf16.msra.mxu0 0
  %751 = vmatprep.subr.bf16.mxu0 0
  %752 = vmatpush2.bf16.msra.mxu0 0
  %753 = vmatprep.mubr.bf16.mxu0 0
  %754 = vmatmul.mubr.bf16.gmra.mxu0 %v713
  %v755 = vpop.f32.mrf.mxu0
  %v756 = vadd.f32 %v687, %v755
  %v757 = vpop.f32.mrf.mxu0
  %v758 = vadd.f32 %v691, %v757
  %v759 = vpop.f32.mrf.mxu0
  %v760 = vpop.f32.mrf.mxu0
  %761 = vdwg.mxu0
  %v762 = vld [vmem:[%s2] sm:$0xff]
  %v763 = vld [vmem:[%s2 + $0x8] sm:$0xff]
  %v764 = vld [vmem:[%s2 + $0x10] sm:$0xff]
  %v765 = vld [vmem:[%s2 + $0x18] sm:$0xff]
  %v766 = vld [vmem:[%s2 + $0x20] sm:$0xff]
  %v767 = vld [vmem:[%s2 + $0x28] sm:$0xff]
  %v768 = vld [vmem:[%s2 + $0x30] sm:$0xff]
  %v769 = vld [vmem:[%s2 + $0x38] sm:$0xff]
  %v778 = vunpack.c.l.b16 %v762
  %v779 = vunpack.c.h.b16 %v762
  %v780 = vunpack.c.l.b16 %v763
  %v781 = vunpack.c.h.b16 %v763
  %v782 = vunpack.c.l.b16 %v764
  %v783 = vunpack.c.h.b16 %v764
  %v784 = vunpack.c.l.b16 %v765
  %v785 = vunpack.c.h.b16 %v765
  %v786 = vunpack.c.l.b16 %v766
  %v787 = vunpack.c.h.b16 %v766
  %v788 = vunpack.c.l.b16 %v767
  %v789 = vunpack.c.h.b16 %v767
  %v790 = vunpack.c.l.b16 %v768
  %v791 = vunpack.c.h.b16 %v768
  %v792 = vunpack.c.l.b16 %v769
  %v793 = vunpack.c.h.b16 %v769
  %v794 = vpack.c.b16 %v780, %v778
  %v795 = vpack.c.b16 %v781, %v779
  %v796 = vpack.c.b16 %v784, %v782
  %v797 = vpack.c.b16 %v785, %v783
  %v798 = vpack.c.b16 %v788, %v786
  %v799 = vpack.c.b16 %v789, %v787
  %v800 = vpack.c.b16 %v792, %v790
  %v801 = vpack.c.b16 %v793, %v791
  %v811 = vsel %vm166, %v673, 0
  %813 = vmatprep.subr.bf16.mxu0 0
  %814 = vmatpush1.bf16.msra.mxu0 0
  %815 = vmatprep.subr.bf16.mxu0 0
  %816 = vmatpush1.bf16.msra.mxu0 0
  %817 = vmatprep.subr.bf16.mxu0 0
  %818 = vmatpush1.bf16.msra.mxu0 0
  %819 = vmatprep.subr.bf16.mxu0 0
  %820 = vmatpush1.bf16.msra.mxu0 0
  %821 = vmatprep.subr.bf16.mxu0 %v801
  %822 = vmatpush1.bf16.msra.mxu0 %v800
  %823 = vmatprep.subr.bf16.mxu0 %v799
  %824 = vmatpush1.bf16.msra.mxu0 %v798
  %825 = vmatprep.subr.bf16.mxu0 %v797
  %826 = vmatpush1.bf16.msra.mxu0 %v796
  %827 = vmatprep.subr.bf16.mxu0 %v795
  %828 = vmatpush1.bf16.msra.mxu0 %v794
  %829 = vmatprep.subr.bf16.mxu0 0
  %830 = vmatpush2.bf16.msra.mxu0 0
  %831 = vmatprep.subr.bf16.mxu0 0
  %832 = vmatpush2.bf16.msra.mxu0 0
  %833 = vmatprep.subr.bf16.mxu0 0
  %834 = vmatpush2.bf16.msra.mxu0 0
  %835 = vmatprep.subr.bf16.mxu0 0
  %836 = vmatpush2.bf16.msra.mxu0 0
  %837 = vmatprep.subr.bf16.mxu0 0
  %838 = vmatpush2.bf16.msra.mxu0 0
  %839 = vmatprep.subr.bf16.mxu0 0
  %840 = vmatpush2.bf16.msra.mxu0 0
  %841 = vmatprep.subr.bf16.mxu0 0
  %842 = vmatpush2.bf16.msra.mxu0 0
  %843 = vmatprep.subr.bf16.mxu0 0
  %844 = vmatpush2.bf16.msra.mxu0 0
  %845 = vmatprep.mubr.bf16.mxu0 0
  %846 = vmatmul.mubr.bf16.gmra.mxu0 %v811
  %v847 = vpop.f32.mrf.mxu0
  %v848 = vadd.f32 0.0, %v847
  %v849 = vpop.f32.mrf.mxu0
  %v850 = vadd.f32 0.0, %v849
  %v851 = vpop.f32.mrf.mxu0
  %v852 = vpop.f32.mrf.mxu0
  %853 = vdwg.mxu0
  %v854 = vadd.f32 %v756, %v848
  %v855 = vadd.f32 %v758, %v850
  %v856 = vxor.u32 %v854, 2147483648
  %v857 = vxor.u32 %v855, 2147483648
  %v858 = vmul.f32 %v856, 1.442695
  %v859 = vpow.pop %v858
  %v860 = vmul.f32 %v857, 1.442695
  %v861 = vpow.pop %v860
  %v862 = vadd.f32 %v859, 1.0
  %v863 = vadd.f32 %v861, 1.0
  %v864 = vrcp.pop %v862
  %v865 = vmul.f32 1.0, %v864
  %v866 = vrcp.pop %v863
  %v867 = vmul.f32 1.0, %v866
  %v868 = vtanh.pop %v855
  %v869 = vmul.f32 %v865, %v666
  %871 = vrot.lane.b32.xlu0 %v868, 64
  %v872 = vpop.permute.xlu0 %871
  %v874 = vmul.f32 %v865, %v872
  %876 = vrot.lane.b32.xlu0 %v874, 64
  %v877 = vpop.permute.xlu0 %876
  %v879 = vadd.f32 %v869, %v877
  %v880 = vtanh.pop %v879
  %882 = vrot.lane.b32.xlu0 %v880, 64
  %v883 = vpop.permute.xlu0 %882
  %v885 = vmul.f32 %v867, %v883
  %v886 = vpack.c.bf16 %v885, %v885
  %s887 = scalar_lea.vmem %s4, 3
  %888 = vst.msk [vmem:[%s887] sm:$0x1] %vm248, %v886
  %s889 = scalar_lea.vmem %s0, 4
  %v890 = vld [vmem:[%s889] sm:$0x1]
  %v891 = vld [vmem:[%s1] sm:$0xff]
  %v892 = vld [vmem:[%s1 + $0x8] sm:$0xff]
  %v893 = vld [vmem:[%s1 + $0x10] sm:$0xff]
  %v894 = vld [vmem:[%s1 + $0x18] sm:$0x77]
  %v895 = vld [vmem:[%s3] sm:$0x3]
  %v897 = vlaneseq
  %v898 = vshrl.u32 %v897, 7
  %v899 = vsub.s32 0, %v898
  %v900 = vrot.slane %v895, %v899
  %v901 = vlaneseq
  %v902 = vshrl.u32 %v901, 7
  %v903 = vsub.s32 1, %v902
  %v904 = vrot.slane %v895, %v903
  %v911 = vunpack.c.l.b16 %v891
  %v912 = vunpack.c.h.b16 %v891
  %v913 = vunpack.c.l.b16 %v892
  %v914 = vunpack.c.h.b16 %v892
  %v915 = vunpack.c.l.b16 %v893
  %v916 = vunpack.c.h.b16 %v893
  %v917 = vunpack.c.l.b16 %v894
  %v918 = vunpack.c.h.b16 %v894
  %v919 = vpack.c.b16 %v913, %v911
  %v920 = vpack.c.b16 %v914, %v912
  %v921 = vpack.c.b16 %v917, %v915
  %v922 = vpack.c.b16 %v918, %v916
  %v926 = vsel %vm63, %v890, 0
  %v929 = vand.u32 %v921, %v70
  %v932 = vand.u32 %v922, %v70
  %934 = vmatprep.subr.bf16.mxu0 0
  %935 = vmatpush1.bf16.msra.mxu0 0
  %936 = vmatprep.subr.bf16.mxu0 0
  %937 = vmatpush1.bf16.msra.mxu0 0
  %938 = vmatprep.subr.bf16.mxu0 0
  %939 = vmatpush1.bf16.msra.mxu0 0
  %940 = vmatprep.subr.bf16.mxu0 0
  %941 = vmatpush1.bf16.msra.mxu0 0
  %942 = vmatprep.subr.bf16.mxu0 0
  %943 = vmatpush1.bf16.msra.mxu0 0
  %944 = vmatprep.subr.bf16.mxu0 0
  %945 = vmatpush1.bf16.msra.mxu0 0
  %946 = vmatprep.subr.bf16.mxu0 %v932
  %947 = vmatpush1.bf16.msra.mxu0 %v929
  %948 = vmatprep.subr.bf16.mxu0 %v920
  %949 = vmatpush1.bf16.msra.mxu0 %v919
  %950 = vmatprep.subr.bf16.mxu0 0
  %951 = vmatpush2.bf16.msra.mxu0 0
  %952 = vmatprep.subr.bf16.mxu0 0
  %953 = vmatpush2.bf16.msra.mxu0 0
  %954 = vmatprep.subr.bf16.mxu0 0
  %955 = vmatpush2.bf16.msra.mxu0 0
  %956 = vmatprep.subr.bf16.mxu0 0
  %957 = vmatpush2.bf16.msra.mxu0 0
  %958 = vmatprep.subr.bf16.mxu0 0
  %959 = vmatpush2.bf16.msra.mxu0 0
  %960 = vmatprep.subr.bf16.mxu0 0
  %961 = vmatpush2.bf16.msra.mxu0 0
  %962 = vmatprep.subr.bf16.mxu0 0
  %963 = vmatpush2.bf16.msra.mxu0 0
  %964 = vmatprep.subr.bf16.mxu0 0
  %965 = vmatpush2.bf16.msra.mxu0 0
  %966 = vmatprep.mubr.bf16.mxu0 0
  %967 = vmatmul.mubr.bf16.gmra.mxu0 %v926
  %v968 = vpop.f32.mrf.mxu0
  %v969 = vadd.f32 %v900, %v968
  %v970 = vpop.f32.mrf.mxu0
  %v971 = vadd.f32 %v904, %v970
  %v972 = vpop.f32.mrf.mxu0
  %v973 = vpop.f32.mrf.mxu0
  %974 = vdwg.mxu0
  %v975 = vld [vmem:[%s2] sm:$0xff]
  %v976 = vld [vmem:[%s2 + $0x8] sm:$0xff]
  %v977 = vld [vmem:[%s2 + $0x10] sm:$0xff]
  %v978 = vld [vmem:[%s2 + $0x18] sm:$0xff]
  %v979 = vld [vmem:[%s2 + $0x20] sm:$0xff]
  %v980 = vld [vmem:[%s2 + $0x28] sm:$0xff]
  %v981 = vld [vmem:[%s2 + $0x30] sm:$0xff]
  %v982 = vld [vmem:[%s2 + $0x38] sm:$0xff]
  %v991 = vunpack.c.l.b16 %v975
  %v992 = vunpack.c.h.b16 %v975
  %v993 = vunpack.c.l.b16 %v976
  %v994 = vunpack.c.h.b16 %v976
  %v995 = vunpack.c.l.b16 %v977
  %v996 = vunpack.c.h.b16 %v977
  %v997 = vunpack.c.l.b16 %v978
  %v998 = vunpack.c.h.b16 %v978
  %v999 = vunpack.c.l.b16 %v979
  %v1000 = vunpack.c.h.b16 %v979
  %v1001 = vunpack.c.l.b16 %v980
  %v1002 = vunpack.c.h.b16 %v980
  %v1003 = vunpack.c.l.b16 %v981
  %v1004 = vunpack.c.h.b16 %v981
  %v1005 = vunpack.c.l.b16 %v982
  %v1006 = vunpack.c.h.b16 %v982
  %v1007 = vpack.c.b16 %v993, %v991
  %v1008 = vpack.c.b16 %v994, %v992
  %v1009 = vpack.c.b16 %v997, %v995
  %v1010 = vpack.c.b16 %v998, %v996
  %v1011 = vpack.c.b16 %v1001, %v999
  %v1012 = vpack.c.b16 %v1002, %v1000
  %v1013 = vpack.c.b16 %v1005, %v1003
  %v1014 = vpack.c.b16 %v1006, %v1004
  %v1024 = vsel %vm166, %v886, 0
  %1026 = vmatprep.subr.bf16.mxu0 0
  %1027 = vmatpush1.bf16.msra.mxu0 0
  %1028 = vmatprep.subr.bf16.mxu0 0
  %1029 = vmatpush1.bf16.msra.mxu0 0
  %1030 = vmatprep.subr.bf16.mxu0 0
  %1031 = vmatpush1.bf16.msra.mxu0 0
  %1032 = vmatprep.subr.bf16.mxu0 0
  %1033 = vmatpush1.bf16.msra.mxu0 0
  %1034 = vmatprep.subr.bf16.mxu0 %v1014
  %1035 = vmatpush1.bf16.msra.mxu0 %v1013
  %1036 = vmatprep.subr.bf16.mxu0 %v1012
  %1037 = vmatpush1.bf16.msra.mxu0 %v1011
  %1038 = vmatprep.subr.bf16.mxu0 %v1010
  %1039 = vmatpush1.bf16.msra.mxu0 %v1009
  %1040 = vmatprep.subr.bf16.mxu0 %v1008
  %1041 = vmatpush1.bf16.msra.mxu0 %v1007
  %1042 = vmatprep.subr.bf16.mxu0 0
  %1043 = vmatpush2.bf16.msra.mxu0 0
  %1044 = vmatprep.subr.bf16.mxu0 0
  %1045 = vmatpush2.bf16.msra.mxu0 0
  %1046 = vmatprep.subr.bf16.mxu0 0
  %1047 = vmatpush2.bf16.msra.mxu0 0
  %1048 = vmatprep.subr.bf16.mxu0 0
  %1049 = vmatpush2.bf16.msra.mxu0 0
  %1050 = vmatprep.subr.bf16.mxu0 0
  %1051 = vmatpush2.bf16.msra.mxu0 0
  %1052 = vmatprep.subr.bf16.mxu0 0
  %1053 = vmatpush2.bf16.msra.mxu0 0
  %1054 = vmatprep.subr.bf16.mxu0 0
  %1055 = vmatpush2.bf16.msra.mxu0 0
  %1056 = vmatprep.subr.bf16.mxu0 0
  %1057 = vmatpush2.bf16.msra.mxu0 0
  %1058 = vmatprep.mubr.bf16.mxu0 0
  %1059 = vmatmul.mubr.bf16.gmra.mxu0 %v1024
  %v1060 = vpop.f32.mrf.mxu0
  %v1061 = vadd.f32 0.0, %v1060
  %v1062 = vpop.f32.mrf.mxu0
  %v1063 = vadd.f32 0.0, %v1062
  %v1064 = vpop.f32.mrf.mxu0
  %v1065 = vpop.f32.mrf.mxu0
  %1066 = vdwg.mxu0
  %v1067 = vadd.f32 %v969, %v1061
  %v1068 = vadd.f32 %v971, %v1063
  %v1069 = vxor.u32 %v1067, 2147483648
  %v1070 = vxor.u32 %v1068, 2147483648
  %v1071 = vmul.f32 %v1069, 1.442695
  %v1072 = vpow.pop %v1071
  %v1073 = vmul.f32 %v1070, 1.442695
  %v1074 = vpow.pop %v1073
  %v1075 = vadd.f32 %v1072, 1.0
  %v1076 = vadd.f32 %v1074, 1.0
  %v1077 = vrcp.pop %v1075
  %v1078 = vmul.f32 1.0, %v1077
  %v1079 = vrcp.pop %v1076
  %v1080 = vmul.f32 1.0, %v1079
  %v1081 = vtanh.pop %v1068
  %v1082 = vmul.f32 %v1078, %v879
  %1084 = vrot.lane.b32.xlu0 %v1081, 64
  %v1085 = vpop.permute.xlu0 %1084
  %v1087 = vmul.f32 %v1078, %v1085
  %1089 = vrot.lane.b32.xlu0 %v1087, 64
  %v1090 = vpop.permute.xlu0 %1089
  %v1092 = vadd.f32 %v1082, %v1090
  %v1093 = vtanh.pop %v1092
  %1095 = vrot.lane.b32.xlu0 %v1093, 64
  %v1096 = vpop.permute.xlu0 %1095
  %v1098 = vmul.f32 %v1080, %v1096
  %v1099 = vpack.c.bf16 %v1098, %v1098
  %s1100 = scalar_lea.vmem %s4, 4
  %1101 = vst.msk [vmem:[%s1100] sm:$0x1] %vm248, %v1099
  %s1102 = scalar_lea.vmem %s0, 5
  %v1103 = vld [vmem:[%s1102] sm:$0x1]
  %v1104 = vld [vmem:[%s1] sm:$0xff]
  %v1105 = vld [vmem:[%s1 + $0x8] sm:$0xff]
  %v1106 = vld [vmem:[%s1 + $0x10] sm:$0xff]
  %v1107 = vld [vmem:[%s1 + $0x18] sm:$0x77]
  %v1108 = vld [vmem:[%s3] sm:$0x3]
  %v1110 = vlaneseq
  %v1111 = vshrl.u32 %v1110, 7
  %v1112 = vsub.s32 0, %v1111
  %v1113 = vrot.slane %v1108, %v1112
  %v1114 = vlaneseq
  %v1115 = vshrl.u32 %v1114, 7
  %v1116 = vsub.s32 1, %v1115
  %v1117 = vrot.slane %v1108, %v1116
  %v1124 = vunpack.c.l.b16 %v1104
  %v1125 = vunpack.c.h.b16 %v1104
  %v1126 = vunpack.c.l.b16 %v1105
  %v1127 = vunpack.c.h.b16 %v1105
  %v1128 = vunpack.c.l.b16 %v1106
  %v1129 = vunpack.c.h.b16 %v1106
  %v1130 = vunpack.c.l.b16 %v1107
  %v1131 = vunpack.c.h.b16 %v1107
  %v1132 = vpack.c.b16 %v1126, %v1124
  %v1133 = vpack.c.b16 %v1127, %v1125
  %v1134 = vpack.c.b16 %v1130, %v1128
  %v1135 = vpack.c.b16 %v1131, %v1129
  %v1139 = vsel %vm63, %v1103, 0
  %v1142 = vand.u32 %v1134, %v70
  %v1145 = vand.u32 %v1135, %v70
  %1147 = vmatprep.subr.bf16.mxu0 0
  %1148 = vmatpush1.bf16.msra.mxu0 0
  %1149 = vmatprep.subr.bf16.mxu0 0
  %1150 = vmatpush1.bf16.msra.mxu0 0
  %1151 = vmatprep.subr.bf16.mxu0 0
  %1152 = vmatpush1.bf16.msra.mxu0 0
  %1153 = vmatprep.subr.bf16.mxu0 0
  %1154 = vmatpush1.bf16.msra.mxu0 0
  %1155 = vmatprep.subr.bf16.mxu0 0
  %1156 = vmatpush1.bf16.msra.mxu0 0
  %1157 = vmatprep.subr.bf16.mxu0 0
  %1158 = vmatpush1.bf16.msra.mxu0 0
  %1159 = vmatprep.subr.bf16.mxu0 %v1145
  %1160 = vmatpush1.bf16.msra.mxu0 %v1142
  %1161 = vmatprep.subr.bf16.mxu0 %v1133
  %1162 = vmatpush1.bf16.msra.mxu0 %v1132
  %1163 = vmatprep.subr.bf16.mxu0 0
  %1164 = vmatpush2.bf16.msra.mxu0 0
  %1165 = vmatprep.subr.bf16.mxu0 0
  %1166 = vmatpush2.bf16.msra.mxu0 0
  %1167 = vmatprep.subr.bf16.mxu0 0
  %1168 = vmatpush2.bf16.msra.mxu0 0
  %1169 = vmatprep.subr.bf16.mxu0 0
  %1170 = vmatpush2.bf16.msra.mxu0 0
  %1171 = vmatprep.subr.bf16.mxu0 0
  %1172 = vmatpush2.bf16.msra.mxu0 0
  %1173 = vmatprep.subr.bf16.mxu0 0
  %1174 = vmatpush2.bf16.msra.mxu0 0
  %1175 = vmatprep.subr.bf16.mxu0 0
  %1176 = vmatpush2.bf16.msra.mxu0 0
  %1177 = vmatprep.subr.bf16.mxu0 0
  %1178 = vmatpush2.bf16.msra.mxu0 0
  %1179 = vmatprep.mubr.bf16.mxu0 0
  %1180 = vmatmul.mubr.bf16.gmra.mxu0 %v1139
  %v1181 = vpop.f32.mrf.mxu0
  %v1182 = vadd.f32 %v1113, %v1181
  %v1183 = vpop.f32.mrf.mxu0
  %v1184 = vadd.f32 %v1117, %v1183
  %v1185 = vpop.f32.mrf.mxu0
  %v1186 = vpop.f32.mrf.mxu0
  %1187 = vdwg.mxu0
  %v1188 = vld [vmem:[%s2] sm:$0xff]
  %v1189 = vld [vmem:[%s2 + $0x8] sm:$0xff]
  %v1190 = vld [vmem:[%s2 + $0x10] sm:$0xff]
  %v1191 = vld [vmem:[%s2 + $0x18] sm:$0xff]
  %v1192 = vld [vmem:[%s2 + $0x20] sm:$0xff]
  %v1193 = vld [vmem:[%s2 + $0x28] sm:$0xff]
  %v1194 = vld [vmem:[%s2 + $0x30] sm:$0xff]
  %v1195 = vld [vmem:[%s2 + $0x38] sm:$0xff]
  %v1204 = vunpack.c.l.b16 %v1188
  %v1205 = vunpack.c.h.b16 %v1188
  %v1206 = vunpack.c.l.b16 %v1189
  %v1207 = vunpack.c.h.b16 %v1189
  %v1208 = vunpack.c.l.b16 %v1190
  %v1209 = vunpack.c.h.b16 %v1190
  %v1210 = vunpack.c.l.b16 %v1191
  %v1211 = vunpack.c.h.b16 %v1191
  %v1212 = vunpack.c.l.b16 %v1192
  %v1213 = vunpack.c.h.b16 %v1192
  %v1214 = vunpack.c.l.b16 %v1193
  %v1215 = vunpack.c.h.b16 %v1193
  %v1216 = vunpack.c.l.b16 %v1194
  %v1217 = vunpack.c.h.b16 %v1194
  %v1218 = vunpack.c.l.b16 %v1195
  %v1219 = vunpack.c.h.b16 %v1195
  %v1220 = vpack.c.b16 %v1206, %v1204
  %v1221 = vpack.c.b16 %v1207, %v1205
  %v1222 = vpack.c.b16 %v1210, %v1208
  %v1223 = vpack.c.b16 %v1211, %v1209
  %v1224 = vpack.c.b16 %v1214, %v1212
  %v1225 = vpack.c.b16 %v1215, %v1213
  %v1226 = vpack.c.b16 %v1218, %v1216
  %v1227 = vpack.c.b16 %v1219, %v1217
  %v1237 = vsel %vm166, %v1099, 0
  %1239 = vmatprep.subr.bf16.mxu0 0
  %1240 = vmatpush1.bf16.msra.mxu0 0
  %1241 = vmatprep.subr.bf16.mxu0 0
  %1242 = vmatpush1.bf16.msra.mxu0 0
  %1243 = vmatprep.subr.bf16.mxu0 0
  %1244 = vmatpush1.bf16.msra.mxu0 0
  %1245 = vmatprep.subr.bf16.mxu0 0
  %1246 = vmatpush1.bf16.msra.mxu0 0
  %1247 = vmatprep.subr.bf16.mxu0 %v1227
  %1248 = vmatpush1.bf16.msra.mxu0 %v1226
  %1249 = vmatprep.subr.bf16.mxu0 %v1225
  %1250 = vmatpush1.bf16.msra.mxu0 %v1224
  %1251 = vmatprep.subr.bf16.mxu0 %v1223
  %1252 = vmatpush1.bf16.msra.mxu0 %v1222
  %1253 = vmatprep.subr.bf16.mxu0 %v1221
  %1254 = vmatpush1.bf16.msra.mxu0 %v1220
  %1255 = vmatprep.subr.bf16.mxu0 0
  %1256 = vmatpush2.bf16.msra.mxu0 0
  %1257 = vmatprep.subr.bf16.mxu0 0
  %1258 = vmatpush2.bf16.msra.mxu0 0
  %1259 = vmatprep.subr.bf16.mxu0 0
  %1260 = vmatpush2.bf16.msra.mxu0 0
  %1261 = vmatprep.subr.bf16.mxu0 0
  %1262 = vmatpush2.bf16.msra.mxu0 0
  %1263 = vmatprep.subr.bf16.mxu0 0
  %1264 = vmatpush2.bf16.msra.mxu0 0
  %1265 = vmatprep.subr.bf16.mxu0 0
  %1266 = vmatpush2.bf16.msra.mxu0 0
  %1267 = vmatprep.subr.bf16.mxu0 0
  %1268 = vmatpush2.bf16.msra.mxu0 0
  %1269 = vmatprep.subr.bf16.mxu0 0
  %1270 = vmatpush2.bf16.msra.mxu0 0
  %1271 = vmatprep.mubr.bf16.mxu0 0
  %1272 = vmatmul.mubr.bf16.gmra.mxu0 %v1237
  %v1273 = vpop.f32.mrf.mxu0
  %v1274 = vadd.f32 0.0, %v1273
  %v1275 = vpop.f32.mrf.mxu0
  %v1276 = vadd.f32 0.0, %v1275
  %v1277 = vpop.f32.mrf.mxu0
  %v1278 = vpop.f32.mrf.mxu0
  %1279 = vdwg.mxu0
  %v1280 = vadd.f32 %v1182, %v1274
  %v1281 = vadd.f32 %v1184, %v1276
  %v1282 = vxor.u32 %v1280, 2147483648
  %v1283 = vxor.u32 %v1281, 2147483648
  %v1284 = vmul.f32 %v1282, 1.442695
  %v1285 = vpow.pop %v1284
  %v1286 = vmul.f32 %v1283, 1.442695
  %v1287 = vpow.pop %v1286
  %v1288 = vadd.f32 %v1285, 1.0
  %v1289 = vadd.f32 %v1287, 1.0
  %v1290 = vrcp.pop %v1288
  %v1291 = vmul.f32 1.0, %v1290
  %v1292 = vrcp.pop %v1289
  %v1293 = vmul.f32 1.0, %v1292
  %v1294 = vtanh.pop %v1281
  %v1295 = vmul.f32 %v1291, %v1092
  %1297 = vrot.lane.b32.xlu0 %v1294, 64
  %v1298 = vpop.permute.xlu0 %1297
  %v1300 = vmul.f32 %v1291, %v1298
  %1302 = vrot.lane.b32.xlu0 %v1300, 64
  %v1303 = vpop.permute.xlu0 %1302
  %v1305 = vadd.f32 %v1295, %v1303
  %v1306 = vtanh.pop %v1305
  %1308 = vrot.lane.b32.xlu0 %v1306, 64
  %v1309 = vpop.permute.xlu0 %1308
  %v1311 = vmul.f32 %v1293, %v1309
  %v1312 = vpack.c.bf16 %v1311, %v1311
  %s1313 = scalar_lea.vmem %s4, 5
  %1314 = vst.msk [vmem:[%s1313] sm:$0x1] %vm248, %v1312
  %s1315 = scalar_lea.vmem %s0, 6
  %v1316 = vld [vmem:[%s1315] sm:$0x1]
  %v1317 = vld [vmem:[%s1] sm:$0xff]
  %v1318 = vld [vmem:[%s1 + $0x8] sm:$0xff]
  %v1319 = vld [vmem:[%s1 + $0x10] sm:$0xff]
  %v1320 = vld [vmem:[%s1 + $0x18] sm:$0x77]
  %v1321 = vld [vmem:[%s3] sm:$0x3]
  %v1323 = vlaneseq
  %v1324 = vshrl.u32 %v1323, 7
  %v1325 = vsub.s32 0, %v1324
  %v1326 = vrot.slane %v1321, %v1325
  %v1327 = vlaneseq
  %v1328 = vshrl.u32 %v1327, 7
  %v1329 = vsub.s32 1, %v1328
  %v1330 = vrot.slane %v1321, %v1329
  %v1337 = vunpack.c.l.b16 %v1317
  %v1338 = vunpack.c.h.b16 %v1317
  %v1339 = vunpack.c.l.b16 %v1318
  %v1340 = vunpack.c.h.b16 %v1318
  %v1341 = vunpack.c.l.b16 %v1319
  %v1342 = vunpack.c.h.b16 %v1319
  %v1343 = vunpack.c.l.b16 %v1320
  %v1344 = vunpack.c.h.b16 %v1320
  %v1345 = vpack.c.b16 %v1339, %v1337
  %v1346 = vpack.c.b16 %v1340, %v1338
  %v1347 = vpack.c.b16 %v1343, %v1341
  %v1348 = vpack.c.b16 %v1344, %v1342
  %v1352 = vsel %vm63, %v1316, 0
  %v1355 = vand.u32 %v1347, %v70
  %v1358 = vand.u32 %v1348, %v70
  %1360 = vmatprep.subr.bf16.mxu0 0
  %1361 = vmatpush1.bf16.msra.mxu0 0
  %1362 = vmatprep.subr.bf16.mxu0 0
  %1363 = vmatpush1.bf16.msra.mxu0 0
  %1364 = vmatprep.subr.bf16.mxu0 0
  %1365 = vmatpush1.bf16.msra.mxu0 0
  %1366 = vmatprep.subr.bf16.mxu0 0
  %1367 = vmatpush1.bf16.msra.mxu0 0
  %1368 = vmatprep.subr.bf16.mxu0 0
  %1369 = vmatpush1.bf16.msra.mxu0 0
  %1370 = vmatprep.subr.bf16.mxu0 0
  %1371 = vmatpush1.bf16.msra.mxu0 0
  %1372 = vmatprep.subr.bf16.mxu0 %v1358
  %1373 = vmatpush1.bf16.msra.mxu0 %v1355
  %1374 = vmatprep.subr.bf16.mxu0 %v1346
  %1375 = vmatpush1.bf16.msra.mxu0 %v1345
  %1376 = vmatprep.subr.bf16.mxu0 0
  %1377 = vmatpush2.bf16.msra.mxu0 0
  %1378 = vmatprep.subr.bf16.mxu0 0
  %1379 = vmatpush2.bf16.msra.mxu0 0
  %1380 = vmatprep.subr.bf16.mxu0 0
  %1381 = vmatpush2.bf16.msra.mxu0 0
  %1382 = vmatprep.subr.bf16.mxu0 0
  %1383 = vmatpush2.bf16.msra.mxu0 0
  %1384 = vmatprep.subr.bf16.mxu0 0
  %1385 = vmatpush2.bf16.msra.mxu0 0
  %1386 = vmatprep.subr.bf16.mxu0 0
  %1387 = vmatpush2.bf16.msra.mxu0 0
  %1388 = vmatprep.subr.bf16.mxu0 0
  %1389 = vmatpush2.bf16.msra.mxu0 0
  %1390 = vmatprep.subr.bf16.mxu0 0
  %1391 = vmatpush2.bf16.msra.mxu0 0
  %1392 = vmatprep.mubr.bf16.mxu0 0
  %1393 = vmatmul.mubr.bf16.gmra.mxu0 %v1352
  %v1394 = vpop.f32.mrf.mxu0
  %v1395 = vadd.f32 %v1326, %v1394
  %v1396 = vpop.f32.mrf.mxu0
  %v1397 = vadd.f32 %v1330, %v1396
  %v1398 = vpop.f32.mrf.mxu0
  %v1399 = vpop.f32.mrf.mxu0
  %1400 = vdwg.mxu0
  %v1401 = vld [vmem:[%s2] sm:$0xff]
  %v1402 = vld [vmem:[%s2 + $0x8] sm:$0xff]
  %v1403 = vld [vmem:[%s2 + $0x10] sm:$0xff]
  %v1404 = vld [vmem:[%s2 + $0x18] sm:$0xff]
  %v1405 = vld [vmem:[%s2 + $0x20] sm:$0xff]
  %v1406 = vld [vmem:[%s2 + $0x28] sm:$0xff]
  %v1407 = vld [vmem:[%s2 + $0x30] sm:$0xff]
  %v1408 = vld [vmem:[%s2 + $0x38] sm:$0xff]
  %v1417 = vunpack.c.l.b16 %v1401
  %v1418 = vunpack.c.h.b16 %v1401
  %v1419 = vunpack.c.l.b16 %v1402
  %v1420 = vunpack.c.h.b16 %v1402
  %v1421 = vunpack.c.l.b16 %v1403
  %v1422 = vunpack.c.h.b16 %v1403
  %v1423 = vunpack.c.l.b16 %v1404
  %v1424 = vunpack.c.h.b16 %v1404
  %v1425 = vunpack.c.l.b16 %v1405
  %v1426 = vunpack.c.h.b16 %v1405
  %v1427 = vunpack.c.l.b16 %v1406
  %v1428 = vunpack.c.h.b16 %v1406
  %v1429 = vunpack.c.l.b16 %v1407
  %v1430 = vunpack.c.h.b16 %v1407
  %v1431 = vunpack.c.l.b16 %v1408
  %v1432 = vunpack.c.h.b16 %v1408
  %v1433 = vpack.c.b16 %v1419, %v1417
  %v1434 = vpack.c.b16 %v1420, %v1418
  %v1435 = vpack.c.b16 %v1423, %v1421
  %v1436 = vpack.c.b16 %v1424, %v1422
  %v1437 = vpack.c.b16 %v1427, %v1425
  %v1438 = vpack.c.b16 %v1428, %v1426
  %v1439 = vpack.c.b16 %v1431, %v1429
  %v1440 = vpack.c.b16 %v1432, %v1430
  %v1450 = vsel %vm166, %v1312, 0
  %1452 = vmatprep.subr.bf16.mxu0 0
  %1453 = vmatpush1.bf16.msra.mxu0 0
  %1454 = vmatprep.subr.bf16.mxu0 0
  %1455 = vmatpush1.bf16.msra.mxu0 0
  %1456 = vmatprep.subr.bf16.mxu0 0
  %1457 = vmatpush1.bf16.msra.mxu0 0
  %1458 = vmatprep.subr.bf16.mxu0 0
  %1459 = vmatpush1.bf16.msra.mxu0 0
  %1460 = vmatprep.subr.bf16.mxu0 %v1440
  %1461 = vmatpush1.bf16.msra.mxu0 %v1439
  %1462 = vmatprep.subr.bf16.mxu0 %v1438
  %1463 = vmatpush1.bf16.msra.mxu0 %v1437
  %1464 = vmatprep.subr.bf16.mxu0 %v1436
  %1465 = vmatpush1.bf16.msra.mxu0 %v1435
  %1466 = vmatprep.subr.bf16.mxu0 %v1434
  %1467 = vmatpush1.bf16.msra.mxu0 %v1433
  %1468 = vmatprep.subr.bf16.mxu0 0
  %1469 = vmatpush2.bf16.msra.mxu0 0
  %1470 = vmatprep.subr.bf16.mxu0 0
  %1471 = vmatpush2.bf16.msra.mxu0 0
  %1472 = vmatprep.subr.bf16.mxu0 0
  %1473 = vmatpush2.bf16.msra.mxu0 0
  %1474 = vmatprep.subr.bf16.mxu0 0
  %1475 = vmatpush2.bf16.msra.mxu0 0
  %1476 = vmatprep.subr.bf16.mxu0 0
  %1477 = vmatpush2.bf16.msra.mxu0 0
  %1478 = vmatprep.subr.bf16.mxu0 0
  %1479 = vmatpush2.bf16.msra.mxu0 0
  %1480 = vmatprep.subr.bf16.mxu0 0
  %1481 = vmatpush2.bf16.msra.mxu0 0
  %1482 = vmatprep.subr.bf16.mxu0 0
  %1483 = vmatpush2.bf16.msra.mxu0 0
  %1484 = vmatprep.mubr.bf16.mxu0 0
  %1485 = vmatmul.mubr.bf16.gmra.mxu0 %v1450
  %v1486 = vpop.f32.mrf.mxu0
  %v1487 = vadd.f32 0.0, %v1486
  %v1488 = vpop.f32.mrf.mxu0
  %v1489 = vadd.f32 0.0, %v1488
  %v1490 = vpop.f32.mrf.mxu0
  %v1491 = vpop.f32.mrf.mxu0
  %1492 = vdwg.mxu0
  %v1493 = vadd.f32 %v1395, %v1487
  %v1494 = vadd.f32 %v1397, %v1489
  %v1495 = vxor.u32 %v1493, 2147483648
  %v1496 = vxor.u32 %v1494, 2147483648
  %v1497 = vmul.f32 %v1495, 1.442695
  %v1498 = vpow.pop %v1497
  %v1499 = vmul.f32 %v1496, 1.442695
  %v1500 = vpow.pop %v1499
  %v1501 = vadd.f32 %v1498, 1.0
  %v1502 = vadd.f32 %v1500, 1.0
  %v1503 = vrcp.pop %v1501
  %v1504 = vmul.f32 1.0, %v1503
  %v1505 = vrcp.pop %v1502
  %v1506 = vmul.f32 1.0, %v1505
  %v1507 = vtanh.pop %v1494
  %v1508 = vmul.f32 %v1504, %v1305
  %1510 = vrot.lane.b32.xlu0 %v1507, 64
  %v1511 = vpop.permute.xlu0 %1510
  %v1513 = vmul.f32 %v1504, %v1511
  %1515 = vrot.lane.b32.xlu0 %v1513, 64
  %v1516 = vpop.permute.xlu0 %1515
  %v1518 = vadd.f32 %v1508, %v1516
  %v1519 = vtanh.pop %v1518
  %1521 = vrot.lane.b32.xlu0 %v1519, 64
  %v1522 = vpop.permute.xlu0 %1521
  %v1524 = vmul.f32 %v1506, %v1522
  %v1525 = vpack.c.bf16 %v1524, %v1524
  %s1526 = scalar_lea.vmem %s4, 6
  %1527 = vst.msk [vmem:[%s1526] sm:$0x1] %vm248, %v1525
  %s1528 = scalar_lea.vmem %s0, 7
  %v1529 = vld [vmem:[%s1528] sm:$0x1]
  %v1530 = vld [vmem:[%s1] sm:$0xff]
  %v1531 = vld [vmem:[%s1 + $0x8] sm:$0xff]
  %v1532 = vld [vmem:[%s1 + $0x10] sm:$0xff]
  %v1533 = vld [vmem:[%s1 + $0x18] sm:$0x77]
  %v1534 = vld [vmem:[%s3] sm:$0x3]
  %v1536 = vlaneseq
  %v1537 = vshrl.u32 %v1536, 7
  %v1538 = vsub.s32 0, %v1537
  %v1539 = vrot.slane %v1534, %v1538
  %v1540 = vlaneseq
  %v1541 = vshrl.u32 %v1540, 7
  %v1542 = vsub.s32 1, %v1541
  %v1543 = vrot.slane %v1534, %v1542
  %v1550 = vunpack.c.l.b16 %v1530
  %v1551 = vunpack.c.h.b16 %v1530
  %v1552 = vunpack.c.l.b16 %v1531
  %v1553 = vunpack.c.h.b16 %v1531
  %v1554 = vunpack.c.l.b16 %v1532
  %v1555 = vunpack.c.h.b16 %v1532
  %v1556 = vunpack.c.l.b16 %v1533
  %v1557 = vunpack.c.h.b16 %v1533
  %v1558 = vpack.c.b16 %v1552, %v1550
  %v1559 = vpack.c.b16 %v1553, %v1551
  %v1560 = vpack.c.b16 %v1556, %v1554
  %v1561 = vpack.c.b16 %v1557, %v1555
  %v1565 = vsel %vm63, %v1529, 0
  %v1568 = vand.u32 %v1560, %v70
  %v1571 = vand.u32 %v1561, %v70
  %1573 = vmatprep.subr.bf16.mxu0 0
  %1574 = vmatpush1.bf16.msra.mxu0 0
  %1575 = vmatprep.subr.bf16.mxu0 0
  %1576 = vmatpush1.bf16.msra.mxu0 0
  %1577 = vmatprep.subr.bf16.mxu0 0
  %1578 = vmatpush1.bf16.msra.mxu0 0
  %1579 = vmatprep.subr.bf16.mxu0 0
  %1580 = vmatpush1.bf16.msra.mxu0 0
  %1581 = vmatprep.subr.bf16.mxu0 0
  %1582 = vmatpush1.bf16.msra.mxu0 0
  %1583 = vmatprep.subr.bf16.mxu0 0
  %1584 = vmatpush1.bf16.msra.mxu0 0
  %1585 = vmatprep.subr.bf16.mxu0 %v1571
  %1586 = vmatpush1.bf16.msra.mxu0 %v1568
  %1587 = vmatprep.subr.bf16.mxu0 %v1559
  %1588 = vmatpush1.bf16.msra.mxu0 %v1558
  %1589 = vmatprep.subr.bf16.mxu0 0
  %1590 = vmatpush2.bf16.msra.mxu0 0
  %1591 = vmatprep.subr.bf16.mxu0 0
  %1592 = vmatpush2.bf16.msra.mxu0 0
  %1593 = vmatprep.subr.bf16.mxu0 0
  %1594 = vmatpush2.bf16.msra.mxu0 0
  %1595 = vmatprep.subr.bf16.mxu0 0
  %1596 = vmatpush2.bf16.msra.mxu0 0
  %1597 = vmatprep.subr.bf16.mxu0 0
  %1598 = vmatpush2.bf16.msra.mxu0 0
  %1599 = vmatprep.subr.bf16.mxu0 0
  %1600 = vmatpush2.bf16.msra.mxu0 0
  %1601 = vmatprep.subr.bf16.mxu0 0
  %1602 = vmatpush2.bf16.msra.mxu0 0
  %1603 = vmatprep.subr.bf16.mxu0 0
  %1604 = vmatpush2.bf16.msra.mxu0 0
  %1605 = vmatprep.mubr.bf16.mxu0 0
  %1606 = vmatmul.mubr.bf16.gmra.mxu0 %v1565
  %v1607 = vpop.f32.mrf.mxu0
  %v1608 = vadd.f32 %v1539, %v1607
  %v1609 = vpop.f32.mrf.mxu0
  %v1610 = vadd.f32 %v1543, %v1609
  %v1611 = vpop.f32.mrf.mxu0
  %v1612 = vpop.f32.mrf.mxu0
  %1613 = vdwg.mxu0
  %v1614 = vld [vmem:[%s2] sm:$0xff]
  %v1615 = vld [vmem:[%s2 + $0x8] sm:$0xff]
  %v1616 = vld [vmem:[%s2 + $0x10] sm:$0xff]
  %v1617 = vld [vmem:[%s2 + $0x18] sm:$0xff]
  %v1618 = vld [vmem:[%s2 + $0x20] sm:$0xff]
  %v1619 = vld [vmem:[%s2 + $0x28] sm:$0xff]
  %v1620 = vld [vmem:[%s2 + $0x30] sm:$0xff]
  %v1621 = vld [vmem:[%s2 + $0x38] sm:$0xff]
  %v1630 = vunpack.c.l.b16 %v1614
  %v1631 = vunpack.c.h.b16 %v1614
  %v1632 = vunpack.c.l.b16 %v1615
  %v1633 = vunpack.c.h.b16 %v1615
  %v1634 = vunpack.c.l.b16 %v1616
  %v1635 = vunpack.c.h.b16 %v1616
  %v1636 = vunpack.c.l.b16 %v1617
  %v1637 = vunpack.c.h.b16 %v1617
  %v1638 = vunpack.c.l.b16 %v1618
  %v1639 = vunpack.c.h.b16 %v1618
  %v1640 = vunpack.c.l.b16 %v1619
  %v1641 = vunpack.c.h.b16 %v1619
  %v1642 = vunpack.c.l.b16 %v1620
  %v1643 = vunpack.c.h.b16 %v1620
  %v1644 = vunpack.c.l.b16 %v1621
  %v1645 = vunpack.c.h.b16 %v1621
  %v1646 = vpack.c.b16 %v1632, %v1630
  %v1647 = vpack.c.b16 %v1633, %v1631
  %v1648 = vpack.c.b16 %v1636, %v1634
  %v1649 = vpack.c.b16 %v1637, %v1635
  %v1650 = vpack.c.b16 %v1640, %v1638
  %v1651 = vpack.c.b16 %v1641, %v1639
  %v1652 = vpack.c.b16 %v1644, %v1642
  %v1653 = vpack.c.b16 %v1645, %v1643
  %v1663 = vsel %vm166, %v1525, 0
  %1665 = vmatprep.subr.bf16.mxu0 0
  %1666 = vmatpush1.bf16.msra.mxu0 0
  %1667 = vmatprep.subr.bf16.mxu0 0
  %1668 = vmatpush1.bf16.msra.mxu0 0
  %1669 = vmatprep.subr.bf16.mxu0 0
  %1670 = vmatpush1.bf16.msra.mxu0 0
  %1671 = vmatprep.subr.bf16.mxu0 0
  %1672 = vmatpush1.bf16.msra.mxu0 0
  %1673 = vmatprep.subr.bf16.mxu0 %v1653
  %1674 = vmatpush1.bf16.msra.mxu0 %v1652
  %1675 = vmatprep.subr.bf16.mxu0 %v1651
  %1676 = vmatpush1.bf16.msra.mxu0 %v1650
  %1677 = vmatprep.subr.bf16.mxu0 %v1649
  %1678 = vmatpush1.bf16.msra.mxu0 %v1648
  %1679 = vmatprep.subr.bf16.mxu0 %v1647
  %1680 = vmatpush1.bf16.msra.mxu0 %v1646
  %1681 = vmatprep.subr.bf16.mxu0 0
  %1682 = vmatpush2.bf16.msra.mxu0 0
  %1683 = vmatprep.subr.bf16.mxu0 0
  %1684 = vmatpush2.bf16.msra.mxu0 0
  %1685 = vmatprep.subr.bf16.mxu0 0
  %1686 = vmatpush2.bf16.msra.mxu0 0
  %1687 = vmatprep.subr.bf16.mxu0 0
  %1688 = vmatpush2.bf16.msra.mxu0 0
  %1689 = vmatprep.subr.bf16.mxu0 0
  %1690 = vmatpush2.bf16.msra.mxu0 0
  %1691 = vmatprep.subr.bf16.mxu0 0
  %1692 = vmatpush2.bf16.msra.mxu0 0
  %1693 = vmatprep.subr.bf16.mxu0 0
  %1694 = vmatpush2.bf16.msra.mxu0 0
  %1695 = vmatprep.subr.bf16.mxu0 0
  %1696 = vmatpush2.bf16.msra.mxu0 0
  %1697 = vmatprep.mubr.bf16.mxu0 0
  %1698 = vmatmul.mubr.bf16.gmra.mxu0 %v1663
  %v1699 = vpop.f32.mrf.mxu0
  %v1700 = vadd.f32 0.0, %v1699
  %v1701 = vpop.f32.mrf.mxu0
  %v1702 = vadd.f32 0.0, %v1701
  %v1703 = vpop.f32.mrf.mxu0
  %v1704 = vpop.f32.mrf.mxu0
  %1705 = vdwg.mxu0
  %v1706 = vadd.f32 %v1608, %v1700
  %v1707 = vadd.f32 %v1610, %v1702
  %v1708 = vxor.u32 %v1706, 2147483648
  %v1709 = vxor.u32 %v1707, 2147483648
  %v1710 = vmul.f32 %v1708, 1.442695
  %v1711 = vpow.pop %v1710
  %v1712 = vmul.f32 %v1709, 1.442695
  %v1713 = vpow.pop %v1712
  %v1714 = vadd.f32 %v1711, 1.0
  %v1715 = vadd.f32 %v1713, 1.0
  %v1716 = vrcp.pop %v1714
  %v1717 = vmul.f32 1.0, %v1716
  %v1718 = vrcp.pop %v1715
  %v1719 = vmul.f32 1.0, %v1718
  %v1720 = vtanh.pop %v1707
  %v1721 = vmul.f32 %v1717, %v1518
  %1723 = vrot.lane.b32.xlu0 %v1720, 64
  %v1724 = vpop.permute.xlu0 %1723
  %v1726 = vmul.f32 %v1717, %v1724
  %1728 = vrot.lane.b32.xlu0 %v1726, 64
  %v1729 = vpop.permute.xlu0 %1728
  %v1731 = vadd.f32 %v1721, %v1729
  %v1732 = vtanh.pop %v1731
  %1734 = vrot.lane.b32.xlu0 %v1732, 64
  %v1735 = vpop.permute.xlu0 %1734
  %v1737 = vmul.f32 %v1719, %v1735
  %v1738 = vpack.c.bf16 %v1737, %v1737
  %s1739 = scalar_lea.vmem %s4, 7
  %1740 = vst.msk [vmem:[%s1739] sm:$0x1] %vm248, %v1738
  %1741 = vst.msk [vmem:[#allocation2] sm:$0x1] %vm248, %v1738
  %1743 = vrot.lane.b32.xlu0 %v1731, 64
  %v1744 = vpop.permute.xlu0 %1743
  %vm1746 = vcmask 517120
  %1747 = vst.msk [vmem:[#allocation3] sm:$0x3] %vm1746, %v1744
  // Predicated region
  $region22: #{lstm_forward.1} parent=0 // pred_check
    _
  $region23: #{lstm_forward.1} parent=0 // pred_check_branch
    %1749 = sbr.rel (0) target = $region25
  $region24: #{lstm_forward.1} parent=0 // pred_region
    _
  $region25: #{lstm_forward.1} parent=0 // pred_fallthru
    _
  // Predicated region
  $region26: #{lstm_forward.1} parent=0 // pred_check
    _
  $region27: #{lstm_forward.1} parent=0 // pred_check_branch
    %1751 = sbr.rel (0) target = $region29
  $region28: #{lstm_forward.1} parent=0 // pred_region
    _
  $region29: #{lstm_forward.1} parent=0 // pred_fallthru
    _

</llo_original>
